<compile_context>
chip_gen: v5e
topology: v5e:2x2
jax: 0.10.0
libtpu: 0.0.40
codegen_flags: <defaults>
</compile_context>

<pallas_src>
import math

import jax
import jax.numpy as jnp
from jax.experimental import pallas as pl
from jax.experimental.pallas import tpu as pltpu

IN_DIM = 39        # logical input feature count (nn.Linear(39, 512))
K_PAD = 128        # zero-padded contraction dim for layer 1 (lane-aligned)
HIDDEN = 512
TB_DEFAULT = 512   # maximum batch tile


def _round_up(n: int, m: int) -> int:
    return ((n + m - 1) // m) * m


def _cdiv(a: int, b: int) -> int:
    return (a + b - 1) // b


def _mlp_kernel(x_ref, w1_ref, b1_ref, w2_ref, b2_ref, w3_ref, b3_ref,
                o_ref, xpad_ref):
    # Fused in-kernel input pad (39 -> 128) + f32 -> bf16 cast.
    # The scratch is zeroed every step (cheap, and safe under megacore
    # sharding of the "parallel" batch axis — no cross-step state).
    xpad_ref[...] = jnp.zeros_like(xpad_ref)
    xpad_ref[:, :IN_DIM] = x_ref[...].astype(jnp.bfloat16)
    x = xpad_ref[...]

    # bf16 operands on the MXU, f32 accumulation, biases added in f32.
    h1 = jnp.dot(x, w1_ref[...], preferred_element_type=jnp.float32) + b1_ref[...]
    h1 = jnp.maximum(h1, 0.0).astype(jnp.bfloat16)

    h2 = jnp.dot(h1, w2_ref[...], preferred_element_type=jnp.float32) + b2_ref[...]
    h2 = jnp.maximum(h2, 0.0).astype(jnp.bfloat16)

    h3 = jnp.dot(h2, w3_ref[...], preferred_element_type=jnp.float32) + b3_ref[...]
    h3 = jnp.maximum(h3, 0.0)

    o_ref[...] = h3.astype(o_ref.dtype)


def shared_network_forward(state, params, *, max_tb: int = TB_DEFAULT,
                           out_dtype=jnp.bfloat16):
    """Pallas forward pass. state: (B, 39) -> (B, 512).

    out_dtype defaults to bfloat16 (f32 accumulate inside, single final cast)
    to halve output HBM traffic; pass jnp.float32 to match the PyTorch module
    output dtype exactly.
    """
    w1, b1, w2, b2, w3, b3 = params
    B = state.shape[0]
    state = state.astype(jnp.float32)

    # Batch tiling: tiles are multiples of 16 (bf16 sublane packing).
    # Tiny/medium batches -> one tile (per-step overhead dominates).
    # Padded batch >= 256 -> at least 2 grid steps so v7x's two TensorCores
    # both get work on the "parallel" axis; tile capped at max_tb.
    b16 = _round_up(B, 16)
    if b16 < 256:
        n_steps = 1
        tb = b16
    else:
        n_steps = max(2, _cdiv(b16, max_tb))
        tb = _round_up(_cdiv(b16, n_steps), 16)
    b_pad = n_steps * tb

    x = state if b_pad == B else jnp.pad(state, ((0, b_pad - B), (0, 0)))

    resident = lambda shape: pl.BlockSpec(shape, lambda i: (0, 0))

    out = pl.pallas_call(
        _mlp_kernel,
        out_shape=jax.ShapeDtypeStruct((b_pad, HIDDEN), out_dtype),
        grid=(n_steps,),
        in_specs=[
            pl.BlockSpec((tb, IN_DIM), lambda i: (i, 0)),   # raw f32 activations (streamed)
            resident((K_PAD, HIDDEN)),                      # w1 (bf16, rows 39..127 zero)
            resident((1, HIDDEN)),                          # b1 (f32)
            resident((HIDDEN, HIDDEN)),                     # w2 (bf16)
            resident((1, HIDDEN)),                          # b2 (f32)
            resident((HIDDEN, HIDDEN)),                     # w3 (bf16)
            resident((1, HIDDEN)),                          # b3 (f32)
        ],
        out_specs=pl.BlockSpec((tb, HIDDEN), lambda i: (i, 0)),
        scratch_shapes=[pltpu.VMEM((tb, K_PAD), jnp.bfloat16)],
        compiler_params=pltpu.CompilerParams(
            dimension_semantics=("parallel",),
        ),
    )(x, w1, b1, w2, b2, w3, b3)

    return out[:B]


def init_params(key):
    """f32 params with PyTorch nn.Linear default init
    (uniform(-1/sqrt(fan_in), 1/sqrt(fan_in))); weights stored (in, out)."""
    ks = jax.random.split(key, 6)

    def linear(kw, kb, fan_in, fan_out):
        bound = 1.0 / math.sqrt(fan_in)
        w = jax.random.uniform(kw, (fan_in, fan_out), jnp.float32, -bound, bound)
        b = jax.random.uniform(kb, (1, fan_out), jnp.float32, -bound, bound)
        return w, b

    w1, b1 = linear(ks[0], ks[1], IN_DIM, HIDDEN)
    w2, b2 = linear(ks[2], ks[3], HIDDEN, HIDDEN)
    w3, b3 = linear(ks[4], ks[5], HIDDEN, HIDDEN)
    return (w1, b1, w2, b2, w3, b3)


def to_kernel_params(params_f32):
    """Kernel layout: bf16 weights (w1 zero-padded 39 -> 128 rows — extra rows
    multiply the kernel's zero-padded input lanes, so the math is unchanged),
    f32 biases of shape (1, 512).  bf16 weight storage is an explicit,
    documented precision choice (typical for RL nets)."""
    w1, b1, w2, b2, w3, b3 = params_f32
    w1p = jnp.pad(w1, ((0, K_PAD - IN_DIM), (0, 0))).astype(jnp.bfloat16)
    return (w1p, b1, w2.astype(jnp.bfloat16), b2, w3.astype(jnp.bfloat16), b3)


def reference_forward_f32(state, params_f32):
    """True f32 reference = the original PyTorch SharedNetwork math."""
    w1, b1, w2, b2, w3, b3 = params_f32
    h = jnp.maximum(state @ w1 + b1, 0.0)
    h = jnp.maximum(h @ w2 + b2, 0.0)
    h = jnp.maximum(h @ w3 + b3, 0.0)
    return h


def reference_forward_bf16(state, kernel_params):
    """Mirrors the kernel's bf16-operand / f32-accumulate path exactly."""
    w1, b1, w2, b2, w3, b3 = kernel_params
    x = jnp.pad(state.astype(jnp.float32),
                ((0, 0), (0, K_PAD - IN_DIM))).astype(jnp.bfloat16)
    h = jnp.maximum(jnp.dot(x, w1, preferred_element_type=jnp.float32) + b1, 0.0)
    h = jnp.maximum(
        jnp.dot(h.astype(jnp.bfloat16), w2, preferred_element_type=jnp.float32) + b2, 0.0)
    h = jnp.maximum(
        jnp.dot(h.astype(jnp.bfloat16), w3, preferred_element_type=jnp.float32) + b3, 0.0)
    return h


if __name__ == "__main__":
    key = jax.random.PRNGKey(0)
    k_params, k_state = jax.random.split(key)

    params_f32 = init_params(k_params)
    kparams = to_kernel_params(params_f32)

    # Tiny-batch (RL rollout) path: single tile, grid=(1,), bf16 output.
    state_small = jax.random.normal(k_state, (8, IN_DIM), jnp.float32)
    out_small = jax.block_until_ready(shared_network_forward(state_small, kparams))
    assert out_small.shape == (8, HIDDEN)
    assert out_small.dtype == jnp.bfloat16

    o32 = out_small.astype(jnp.float32)
    ref16 = reference_forward_bf16(state_small, kparams)
    reff32 = reference_forward_f32(state_small, params_f32)
    # Tight check vs the kernel-matched bf16 path; looser check vs true f32.
    assert jnp.allclose(o32, ref16, atol=2e-2, rtol=2e-2)
    assert jnp.allclose(o32, reff32, atol=5e-2, rtol=5e-2)

    # Larger-batch path: multi-step "parallel" grid (v7x megacore split),
    # f32 output requested.
    state_big = jax.random.normal(k_state, (272, IN_DIM), jnp.float32)
    out_big = jax.block_until_ready(
        shared_network_forward(state_big, kparams, out_dtype=jnp.float32))
    assert out_big.shape == (272, HIDDEN)
    assert out_big.dtype == jnp.float32
    assert jnp.allclose(out_big, reference_forward_bf16(state_big, kparams),
                        atol=2e-2, rtol=2e-2)

    print("KERNEL_OK")
</pallas_src>

<mosaic_0001>
module attributes {stable_mosaic.version = 11 : i64} {
  func.func @_mlp_kernel(%arg0: i32, %arg1: memref<16x39xf32, #tpu.memory_space<vmem>>, %arg2: memref<128x512xbf16, #tpu.memory_space<vmem>>, %arg3: memref<1x512xf32, #tpu.memory_space<vmem>>, %arg4: memref<512x512xbf16, #tpu.memory_space<vmem>>, %arg5: memref<1x512xf32, #tpu.memory_space<vmem>>, %arg6: memref<512x512xbf16, #tpu.memory_space<vmem>>, %arg7: memref<1x512xf32, #tpu.memory_space<vmem>>, %arg8: memref<16x512xbf16, #tpu.memory_space<vmem>>, %arg9: memref<16x128xbf16, #tpu.memory_space<vmem>>) attributes {dimension_semantics = [#tpu.dimension_semantics<parallel>], iteration_bounds = array<i64: 1>, scalar_prefetch = 0 : i64, scratch_operands = 1 : i64, tpu.core_type = #tpu.core_type<tc>, window_params = [{transform_indices = @transform_0, window_bounds = array<i64: 16, 39>}, {pipeline_mode = #tpu.pipeline_mode<synchronous>, transform_indices = @transform_1, window_bounds = array<i64: 128, 512>}, {pipeline_mode = #tpu.pipeline_mode<synchronous>, transform_indices = @transform_2, window_bounds = array<i64: 1, 512>}, {pipeline_mode = #tpu.pipeline_mode<synchronous>, transform_indices = @transform_3, window_bounds = array<i64: 512, 512>}, {pipeline_mode = #tpu.pipeline_mode<synchronous>, transform_indices = @transform_4, window_bounds = array<i64: 1, 512>}, {pipeline_mode = #tpu.pipeline_mode<synchronous>, transform_indices = @transform_5, window_bounds = array<i64: 512, 512>}, {pipeline_mode = #tpu.pipeline_mode<synchronous>, transform_indices = @transform_6, window_bounds = array<i64: 1, 512>}, {transform_indices = @transform_7, window_bounds = array<i64: 16, 512>}]} {
    %cst = arith.constant 0.000000e+00 : bf16
    %0 = vector.broadcast %cst : bf16 to vector<16x128xbf16>
    %c0 = arith.constant 0 : index
    %c0_0 = arith.constant 0 : index
    %1 = vector.load %arg9[%c0, %c0_0] : memref<16x128xbf16, #tpu.memory_space<vmem>>, vector<16x128xbf16>
    tpu.vector_store %arg9[%c0, %c0_0], %0 {strides = array<i32>} : memref<16x128xbf16, #tpu.memory_space<vmem>>, vector<16x128xbf16>,
    %c0_1 = arith.constant 0 : index
    %c0_2 = arith.constant 0 : index
    %2 = vector.load %arg1[%c0_1, %c0_2] : memref<16x39xf32, #tpu.memory_space<vmem>>, vector<16x39xf32>
    %3 = arith.truncf %2 : vector<16x39xf32> to vector<16x39xbf16>
    %c0_3 = arith.constant 0 : index
    %c0_4 = arith.constant 0 : index
    %4 = vector.load %arg9[%c0_3, %c0_4] : memref<16x128xbf16, #tpu.memory_space<vmem>>, vector<16x39xbf16>
    tpu.vector_store %arg9[%c0_3, %c0_4], %3 {strides = array<i32>} : memref<16x128xbf16, #tpu.memory_space<vmem>>, vector<16x39xbf16>,
    %c0_5 = arith.constant 0 : index
    %c0_6 = arith.constant 0 : index
    %5 = vector.load %arg9[%c0_5, %c0_6] : memref<16x128xbf16, #tpu.memory_space<vmem>>, vector<16x128xbf16>
    %c0_7 = arith.constant 0 : index
    %c0_8 = arith.constant 0 : index
    %6 = vector.load %arg2[%c0_7, %c0_8] : memref<128x512xbf16, #tpu.memory_space<vmem>>, vector<128x512xbf16>
    %cst_9 = arith.constant dense<0.000000e+00> : vector<16x512xf32>
    %7 = tpu.matmul %5, %6, %cst_9 {dimension_numbers = #tpu.dot_dimension_numbers<[1], [0], [0], [1], [0, 0, 1, 1], [], []>} : vector<16x128xbf16>, vector<128x512xbf16>, vector<16x512xf32> -> vector<16x512xf32>
    %c0_10 = arith.constant 0 : index
    %c0_11 = arith.constant 0 : index
    %8 = vector.load %arg3[%c0_10, %c0_11] : memref<1x512xf32, #tpu.memory_space<vmem>>, vector<1x512xf32>
    %9 = vector.broadcast %8 : vector<1x512xf32> to vector<16x512xf32>
    %10 = arith.addf %7, %9 : vector<16x512xf32>
    %cst_12 = arith.constant 0.000000e+00 : f32
    %11 = vector.broadcast %cst_12 : f32 to vector<16x512xf32>
    %12 = arith.maximumf %10, %11 : vector<16x512xf32>
    %13 = arith.truncf %12 : vector<16x512xf32> to vector<16x512xbf16>
    %c0_13 = arith.constant 0 : index
    %c0_14 = arith.constant 0 : index
    %14 = vector.load %arg4[%c0_13, %c0_14] : memref<512x512xbf16, #tpu.memory_space<vmem>>, vector<512x512xbf16>
    %cst_15 = arith.constant dense<0.000000e+00> : vector<16x512xf32>
    %15 = tpu.matmul %13, %14, %cst_15 {dimension_numbers = #tpu.dot_dimension_numbers<[1], [0], [0], [1], [0, 0, 1, 1], [], []>} : vector<16x512xbf16>, vector<512x512xbf16>, vector<16x512xf32> -> vector<16x512xf32>
    %c0_16 = arith.constant 0 : index
    %c0_17 = arith.constant 0 : index
    %16 = vector.load %arg5[%c0_16, %c0_17] : memref<1x512xf32, #tpu.memory_space<vmem>>, vector<1x512xf32>
    %17 = vector.broadcast %16 : vector<1x512xf32> to vector<16x512xf32>
    %18 = arith.addf %15, %17 : vector<16x512xf32>
    %cst_18 = arith.constant 0.000000e+00 : f32
    %19 = vector.broadcast %cst_18 : f32 to vector<16x512xf32>
    %20 = arith.maximumf %18, %19 : vector<16x512xf32>
    %21 = arith.truncf %20 : vector<16x512xf32> to vector<16x512xbf16>
    %c0_19 = arith.constant 0 : index
    %c0_20 = arith.constant 0 : index
    %22 = vector.load %arg6[%c0_19, %c0_20] : memref<512x512xbf16, #tpu.memory_space<vmem>>, vector<512x512xbf16>
    %cst_21 = arith.constant dense<0.000000e+00> : vector<16x512xf32>
    %23 = tpu.matmul %21, %22, %cst_21 {dimension_numbers = #tpu.dot_dimension_numbers<[1], [0], [0], [1], [0, 0, 1, 1], [], []>} : vector<16x512xbf16>, vector<512x512xbf16>, vector<16x512xf32> -> vector<16x512xf32>
    %c0_22 = arith.constant 0 : index
    %c0_23 = arith.constant 0 : index
    %24 = vector.load %arg7[%c0_22, %c0_23] : memref<1x512xf32, #tpu.memory_space<vmem>>, vector<1x512xf32>
    %25 = vector.broadcast %24 : vector<1x512xf32> to vector<16x512xf32>
    %26 = arith.addf %23, %25 : vector<16x512xf32>
    %cst_24 = arith.constant 0.000000e+00 : f32
    %27 = vector.broadcast %cst_24 : f32 to vector<16x512xf32>
    %28 = arith.maximumf %26, %27 : vector<16x512xf32>
    %29 = arith.truncf %28 : vector<16x512xf32> to vector<16x512xbf16>
    %c0_25 = arith.constant 0 : index
    %c0_26 = arith.constant 0 : index
    %30 = vector.load %arg8[%c0_25, %c0_26] : memref<16x512xbf16, #tpu.memory_space<vmem>>, vector<16x512xbf16>
    tpu.vector_store %arg8[%c0_25, %c0_26], %29 {strides = array<i32>} : memref<16x512xbf16, #tpu.memory_space<vmem>>, vector<16x512xbf16>,
    return
  }
  func.func @transform_0(%arg0: i32) -> (i32, i32) {
    %c0_i32 = arith.constant 0 : i32
    %c0_i32_0 = arith.constant 0 : i32
    return %arg0, %c0_i32 : i32, i32
  }
  func.func @transform_1(%arg0: i32) -> (i32, i32) {
    %c0_i32 = arith.constant 0 : i32
    %c0_i32_0 = arith.constant 0 : i32
    %c0_i32_1 = arith.constant 0 : i32
    return %c0_i32, %c0_i32_0 : i32, i32
  }
  func.func @transform_2(%arg0: i32) -> (i32, i32) {
    %c0_i32 = arith.constant 0 : i32
    %c0_i32_0 = arith.constant 0 : i32
    %c0_i32_1 = arith.constant 0 : i32
    return %c0_i32, %c0_i32_0 : i32, i32
  }
  func.func @transform_3(%arg0: i32) -> (i32, i32) {
    %c0_i32 = arith.constant 0 : i32
    %c0_i32_0 = arith.constant 0 : i32
    %c0_i32_1 = arith.constant 0 : i32
    return %c0_i32, %c0_i32_0 : i32, i32
  }
  func.func @transform_4(%arg0: i32) -> (i32, i32) {
    %c0_i32 = arith.constant 0 : i32
    %c0_i32_0 = arith.constant 0 : i32
    %c0_i32_1 = arith.constant 0 : i32
    return %c0_i32, %c0_i32_0 : i32, i32
  }
  func.func @transform_5(%arg0: i32) -> (i32, i32) {
    %c0_i32 = arith.constant 0 : i32
    %c0_i32_0 = arith.constant 0 : i32
    %c0_i32_1 = arith.constant 0 : i32
    return %c0_i32, %c0_i32_0 : i32, i32
  }
  func.func @transform_6(%arg0: i32) -> (i32, i32) {
    %c0_i32 = arith.constant 0 : i32
    %c0_i32_0 = arith.constant 0 : i32
    %c0_i32_1 = arith.constant 0 : i32
    return %c0_i32, %c0_i32_0 : i32, i32
  }
  func.func @transform_7(%arg0: i32) -> (i32, i32) {
    %c0_i32 = arith.constant 0 : i32
    %c0_i32_0 = arith.constant 0 : i32
    return %arg0, %c0_i32 : i32, i32
  }
}

</mosaic_0001>

<llo_original>
// kernel: tpu_custom_call.1
$region0: #{tpu_custom_call.1}
  #allocation0 [shape = 'u32[]', space=smem, size = 0x4, offset = 0x4, fixed_abs, tag = 'smem constant byte address 0x4 - core index']
  #allocation1 [shape = 'u32[72,128]{1,0:T(1,128)}', space=vmem, size = 0x9000, scoped, tag = 'internal scratch']
  #allocation2 [shape = 'bf16[16,128]{1,0:T(8,128)(2,1)}', space=vmem, size = 0x1000, scoped, tag = 'scratch operand']
  %s0 = inlined_call_operand.hbm [shape: f32[16,39], index: 0, kind: input, shape index: {}]
  %s1 = inlined_call_operand.hbm [shape: bf16[128,512], index: 1, kind: input, shape index: {}]
  %s2 = inlined_call_operand.hbm [shape: f32[1,512], index: 2, kind: input, shape index: {}]
  %s3 = inlined_call_operand.hbm [shape: bf16[512,512], index: 3, kind: input, shape index: {}]
  %s4 = inlined_call_operand.hbm [shape: f32[1,512], index: 4, kind: input, shape index: {}]
  %s5 = inlined_call_operand.hbm [shape: bf16[512,512], index: 5, kind: input, shape index: {}]
  %s6 = inlined_call_operand.vmem [shape: f32[1,512], index: 6, kind: input, shape index: {}]
  %s7 = inlined_call_operand.hbm [shape: bf16[16,512], index: 7, kind: output, shape index: {}]
  %s8 = sld [smem:[#allocation0]]
  $region62: #{tpu_custom_call.1} parent=0
    _
  %s10 = ssub.s32 1, %s8
  %s11 = scalar_select 0, %s10, %s8
  $region1: #{tpu_custom_call.1} parent=0
    #allocation3 [shape = 'u8[8192]{0}', space=vmem, size = 0x2000, scoped, tag = 'input window, operand 0, single buffered']
    #allocation4 [shape = 's32[1]{0}', space=sflag, size = 0x4, scoped, tag = 'scoped memory for tpu_custom_call.1']
    #allocation5 [shape = 's32[1]{0}', space=sflag, size = 0x4, scoped, tag = 'scoped memory for tpu_custom_call.1']
    #allocation6 [shape = 'u8[131072]{0}', space=vmem, size = 0x20000, scoped, tag = 'input window, operand 1, single buffered']
    #allocation7 [shape = 's32[1]{0}', space=sflag, size = 0x4, scoped, tag = 'scoped memory for tpu_custom_call.1']
    #allocation8 [shape = 'u8[2048]{0}', space=vmem, size = 0x800, scoped, tag = 'input window, operand 2, single buffered']
    #allocation9 [shape = 'u8[524288]{0}', space=vmem, size = 0x80000, scoped, tag = 'input window, operand 3, single buffered']
    #allocation10 [shape = 's32[1]{0}', space=sflag, size = 0x4, scoped, tag = 'scoped memory for tpu_custom_call.1']
    #allocation11 [shape = 'u8[2048]{0}', space=vmem, size = 0x800, scoped, tag = 'input window, operand 4, single buffered']
    #allocation12 [shape = 'u8[524288]{0}', space=vmem, size = 0x80000, scoped, tag = 'input window, operand 5, single buffered']
    #allocation13 [shape = 's32[1]{0}', space=sflag, size = 0x4, scoped, tag = 'scoped memory for tpu_custom_call.1']
    #allocation14 [shape = 'u8[16384]{0}', space=vmem, size = 0x4000, scoped, tag = 'output window, operand 0, single buffered']
    %12 = vsyncpa [#allocation4], 0
    %13 = vsyncpa [#allocation7], 0
    %14 = vsyncpa [#allocation10], 0
    %15 = vsyncpa [#allocation13], 0
    %16 = vsyncpa [#allocation5], 0
    // Predicated region
    $region2: #{tpu_custom_call.1} parent=1 // pred_check
      _
    $region3: #{tpu_custom_call.1} parent=1 // pred_check_branch
      %18 = sbr.rel (0) target = $region5
    $region4: #{tpu_custom_call.1} parent=1 // pred_region
      %20 = vsyncadd [#allocation4], 0
      %s21 = sshll.u32 %s0, 4
      %s22 = int_to_ptr.hbm [resolvable:$true] %s21
      %s23 = sshll.u32 [#allocation3], 4
      %s24 = int_to_ptr.vmem [resolvable:$true] %s23
      %29 = dma.hbm_to_vmem [thread:$0]  %s22, 256, %s24, [#allocation4], 128, 128, 8
    $region5: #{tpu_custom_call.1} parent=1 // pred_fallthru
      _
    // Predicated region
    $region6: #{tpu_custom_call.1} parent=1 // pred_check
      _
    $region7: #{tpu_custom_call.1} parent=1 // pred_check_branch
      %31 = sbr.rel (0) target = $region9
    $region8: #{tpu_custom_call.1} parent=1 // pred_region
      %33 = vsyncadd [#allocation7], 0
      %s34 = sshll.u32 %s1, 4
      %s35 = int_to_ptr.hbm [resolvable:$true] %s34
      %s36 = sshll.u32 [#allocation6], 4
      %s37 = int_to_ptr.vmem [resolvable:$true] %s36
      %42 = dma.hbm_to_vmem [thread:$0]  %s35, 4096, %s37, [#allocation7], 256, 256, 16
    $region9: #{tpu_custom_call.1} parent=1 // pred_fallthru
      _
    // Predicated region
    $region10: #{tpu_custom_call.1} parent=1 // pred_check
      _
    $region11: #{tpu_custom_call.1} parent=1 // pred_check_branch
      %44 = sbr.rel (0) target = $region13
    $region12: #{tpu_custom_call.1} parent=1 // pred_region
      %46 = vsyncadd [#allocation7], 0
      %s48 = sshll.u32 %s2, 4
      %s49 = int_to_ptr.hbm [resolvable:$true] %s48
      %s50 = sshll.u32 [#allocation8], 4
      %s51 = int_to_ptr.vmem [resolvable:$true] %s50
      %53 = dma.hbm_to_vmem [thread:$0]  %s49, 64, %s51, [#allocation7]
    $region13: #{tpu_custom_call.1} parent=1 // pred_fallthru
      _
    // Predicated region
    $region14: #{tpu_custom_call.1} parent=1 // pred_check
      _
    $region15: #{tpu_custom_call.1} parent=1 // pred_check_branch
      %55 = sbr.rel (0) target = $region17
    $region16: #{tpu_custom_call.1} parent=1 // pred_region
      %57 = vsyncadd [#allocation10], 0
      %s58 = sshll.u32 %s3, 4
      %s59 = int_to_ptr.hbm [resolvable:$true] %s58
      %s60 = sshll.u32 [#allocation9], 4
      %s61 = int_to_ptr.vmem [resolvable:$true] %s60
      %66 = dma.hbm_to_vmem [thread:$0]  %s59, 16384, %s61, [#allocation10], 256, 256, 16
    $region17: #{tpu_custom_call.1} parent=1 // pred_fallthru
      _
    // Predicated region
    $region18: #{tpu_custom_call.1} parent=1 // pred_check
      _
    $region19: #{tpu_custom_call.1} parent=1 // pred_check_branch
      %68 = sbr.rel (0) target = $region21
    $region20: #{tpu_custom_call.1} parent=1 // pred_region
      %70 = vsyncadd [#allocation10], 0
      %s72 = sshll.u32 %s4, 4
      %s73 = int_to_ptr.hbm [resolvable:$true] %s72
      %s74 = sshll.u32 [#allocation11], 4
      %s75 = int_to_ptr.vmem [resolvable:$true] %s74
      %77 = dma.hbm_to_vmem [thread:$0]  %s73, 64, %s75, [#allocation10]
    $region21: #{tpu_custom_call.1} parent=1 // pred_fallthru
      _
    // Predicated region
    $region22: #{tpu_custom_call.1} parent=1 // pred_check
      _
    $region23: #{tpu_custom_call.1} parent=1 // pred_check_branch
      %79 = sbr.rel (0) target = $region25
    $region24: #{tpu_custom_call.1} parent=1 // pred_region
      %81 = vsyncadd [#allocation13], 0
      %s82 = sshll.u32 %s5, 4
      %s83 = int_to_ptr.hbm [resolvable:$true] %s82
      %s84 = sshll.u32 [#allocation12], 4
      %s85 = int_to_ptr.vmem [resolvable:$true] %s84
      %90 = dma.hbm_to_vmem [thread:$0]  %s83, 16384, %s85, [#allocation13], 256, 256, 16
    $region25: #{tpu_custom_call.1} parent=1 // pred_fallthru
      _
    // Predicated region
    $region26: #{tpu_custom_call.1} parent=1 // pred_check
      _
    $region27: #{tpu_custom_call.1} parent=1 // pred_check_branch
      %92 = sbr.rel (0) target = $region29
    $region28: #{tpu_custom_call.1} parent=1 // pred_region
      _
    $region29: #{tpu_custom_call.1} parent=1 // pred_fallthru
      _
    // Predicated region
    $region30: #{tpu_custom_call.1} parent=1 // pred_check
      _
    $region31: #{tpu_custom_call.1} parent=1 // pred_check_branch
      %94 = sbr.rel (0) target = $region33
    $region32: #{tpu_custom_call.1} parent=1 // pred_region
      %96 = dma.done [#allocation4], 256
    $region33: #{tpu_custom_call.1} parent=1 // pred_fallthru
      _
    // Predicated region
    $region34: #{tpu_custom_call.1} parent=1 // pred_check
      _
    $region35: #{tpu_custom_call.1} parent=1 // pred_check_branch
      %98 = sbr.rel (0) target = $region37
    $region36: #{tpu_custom_call.1} parent=1 // pred_region
      %100 = dma.done [#allocation7], 4096
    $region37: #{tpu_custom_call.1} parent=1 // pred_fallthru
      _
    // Predicated region
    $region38: #{tpu_custom_call.1} parent=1 // pred_check
      _
    $region39: #{tpu_custom_call.1} parent=1 // pred_check_branch
      %102 = sbr.rel (0) target = $region41
    $region40: #{tpu_custom_call.1} parent=1 // pred_region
      %104 = dma.done [#allocation7], 64
    $region41: #{tpu_custom_call.1} parent=1 // pred_fallthru
      _
    // Predicated region
    $region42: #{tpu_custom_call.1} parent=1 // pred_check
      _
    $region43: #{tpu_custom_call.1} parent=1 // pred_check_branch
      %106 = sbr.rel (0) target = $region45
    $region44: #{tpu_custom_call.1} parent=1 // pred_region
      %108 = dma.done [#allocation10], 16384
    $region45: #{tpu_custom_call.1} parent=1 // pred_fallthru
      _
    // Predicated region
    $region46: #{tpu_custom_call.1} parent=1 // pred_check
      _
    $region47: #{tpu_custom_call.1} parent=1 // pred_check_branch
      %110 = sbr.rel (0) target = $region49
    $region48: #{tpu_custom_call.1} parent=1 // pred_region
      %112 = dma.done [#allocation10], 64
    $region49: #{tpu_custom_call.1} parent=1 // pred_fallthru
      _
    // Predicated region
    $region50: #{tpu_custom_call.1} parent=1 // pred_check
      _
    $region51: #{tpu_custom_call.1} parent=1 // pred_check_branch
      %114 = sbr.rel (0) target = $region53
    $region52: #{tpu_custom_call.1} parent=1 // pred_region
      %116 = dma.done [#allocation13], 16384
    $region53: #{tpu_custom_call.1} parent=1 // pred_fallthru
      _
    %118 = vst [vmem:[#allocation2] sm:$0xf] 0
    %119 = vst [vmem:[#allocation2 + $0x4] sm:$0xf] 0
    %v120 = vld [vmem:[#allocation3] sm:$0xff]
    %v121 = vld [vmem:[#allocation3 + $0x8] sm:$0xff]
    %v122 = vpack.c.bf16 %v120, %v120
    %v123 = vpack.c.bf16 %v121, %v121
    %vm124 = vcmask 314368
    %125 = vst.msk [vmem:[#allocation2] sm:$0xf] %vm124, %v122
    %126 = vst.msk [vmem:[#allocation2 + $0x4] sm:$0xf] %vm124, %v123
    %v127 = vld [vmem:[#allocation2] sm:$0xf]
    %v128 = vld [vmem:[#allocation2 + $0x4] sm:$0xf]
    %v129 = vld [vmem:[#allocation6] sm:$0xff]
    %v130 = vld [vmem:[#allocation6 + $0x8] sm:$0xff]
    %v131 = vld [vmem:[#allocation6 + $0x10] sm:$0xff]
    %v132 = vld [vmem:[#allocation6 + $0x18] sm:$0xff]
    %v133 = vld [vmem:[#allocation6 + $0x20] sm:$0xff]
    %v134 = vld [vmem:[#allocation6 + $0x28] sm:$0xff]
    %v135 = vld [vmem:[#allocation6 + $0x30] sm:$0xff]
    %v136 = vld [vmem:[#allocation6 + $0x38] sm:$0xff]
    %v137 = vld [vmem:[#allocation6 + $0x40] sm:$0xff]
    %v138 = vld [vmem:[#allocation6 + $0x48] sm:$0xff]
    %v139 = vld [vmem:[#allocation6 + $0x50] sm:$0xff]
    %v140 = vld [vmem:[#allocation6 + $0x58] sm:$0xff]
    %v141 = vld [vmem:[#allocation6 + $0x60] sm:$0xff]
    %v142 = vld [vmem:[#allocation6 + $0x68] sm:$0xff]
    %v143 = vld [vmem:[#allocation6 + $0x70] sm:$0xff]
    %v144 = vld [vmem:[#allocation6 + $0x78] sm:$0xff]
    %v145 = vld [vmem:[#allocation6 + $0x80] sm:$0xff]
    %v146 = vld [vmem:[#allocation6 + $0x88] sm:$0xff]
    %v147 = vld [vmem:[#allocation6 + $0x90] sm:$0xff]
    %v148 = vld [vmem:[#allocation6 + $0x98] sm:$0xff]
    %v149 = vld [vmem:[#allocation6 + $0xa0] sm:$0xff]
    %v150 = vld [vmem:[#allocation6 + $0xa8] sm:$0xff]
    %v151 = vld [vmem:[#allocation6 + $0xb0] sm:$0xff]
    %v152 = vld [vmem:[#allocation6 + $0xb8] sm:$0xff]
    %v153 = vld [vmem:[#allocation6 + $0xc0] sm:$0xff]
    %v154 = vld [vmem:[#allocation6 + $0xc8] sm:$0xff]
    %v155 = vld [vmem:[#allocation6 + $0xd0] sm:$0xff]
    %v156 = vld [vmem:[#allocation6 + $0xd8] sm:$0xff]
    %v157 = vld [vmem:[#allocation6 + $0xe0] sm:$0xff]
    %v158 = vld [vmem:[#allocation6 + $0xe8] sm:$0xff]
    %v159 = vld [vmem:[#allocation6 + $0xf0] sm:$0xff]
    %v160 = vld [vmem:[#allocation6 + $0xf8] sm:$0xff]
    %v161 = vld [vmem:[#allocation8] sm:$0xf]
    %v163 = vperm.slane %v161, 0
    %v164 = vperm.slane %v161, 1
    %v165 = vperm.slane %v161, 2
    %v166 = vperm.slane %v161, 3
    %v173 = vunpack.c.l.b16 %v127
    %v174 = vunpack.c.l.b16 %v128
    %v175 = vpack.c.b16 %v174, %v173
    %v209 = vunpack.c.l.b16 %v129
    %v210 = vunpack.c.h.b16 %v129
    %v211 = vunpack.c.l.b16 %v130
    %v212 = vunpack.c.h.b16 %v130
    %v213 = vunpack.c.l.b16 %v131
    %v214 = vunpack.c.h.b16 %v131
    %v215 = vunpack.c.l.b16 %v132
    %v216 = vunpack.c.h.b16 %v132
    %v217 = vunpack.c.l.b16 %v133
    %v218 = vunpack.c.h.b16 %v133
    %v219 = vunpack.c.l.b16 %v134
    %v220 = vunpack.c.h.b16 %v134
    %v221 = vunpack.c.l.b16 %v135
    %v222 = vunpack.c.h.b16 %v135
    %v223 = vunpack.c.l.b16 %v136
    %v224 = vunpack.c.h.b16 %v136
    %v225 = vunpack.c.l.b16 %v137
    %v226 = vunpack.c.h.b16 %v137
    %v227 = vunpack.c.l.b16 %v138
    %v228 = vunpack.c.h.b16 %v138
    %v229 = vunpack.c.l.b16 %v139
    %v230 = vunpack.c.h.b16 %v139
    %v231 = vunpack.c.l.b16 %v140
    %v232 = vunpack.c.h.b16 %v140
    %v233 = vunpack.c.l.b16 %v141
    %v234 = vunpack.c.h.b16 %v141
    %v235 = vunpack.c.l.b16 %v142
    %v236 = vunpack.c.h.b16 %v142
    %v237 = vunpack.c.l.b16 %v143
    %v238 = vunpack.c.h.b16 %v143
    %v239 = vunpack.c.l.b16 %v144
    %v240 = vunpack.c.h.b16 %v144
    %v241 = vunpack.c.l.b16 %v145
    %v242 = vunpack.c.h.b16 %v145
    %v243 = vunpack.c.l.b16 %v146
    %v244 = vunpack.c.h.b16 %v146
    %v245 = vunpack.c.l.b16 %v147
    %v246 = vunpack.c.h.b16 %v147
    %v247 = vunpack.c.l.b16 %v148
    %v248 = vunpack.c.h.b16 %v148
    %v249 = vunpack.c.l.b16 %v149
    %v250 = vunpack.c.h.b16 %v149
    %v251 = vunpack.c.l.b16 %v150
    %v252 = vunpack.c.h.b16 %v150
    %v253 = vunpack.c.l.b16 %v151
    %v254 = vunpack.c.h.b16 %v151
    %v255 = vunpack.c.l.b16 %v152
    %v256 = vunpack.c.h.b16 %v152
    %v257 = vunpack.c.l.b16 %v153
    %v258 = vunpack.c.h.b16 %v153
    %v259 = vunpack.c.l.b16 %v154
    %v260 = vunpack.c.h.b16 %v154
    %v261 = vunpack.c.l.b16 %v155
    %v262 = vunpack.c.h.b16 %v155
    %v263 = vunpack.c.l.b16 %v156
    %v264 = vunpack.c.h.b16 %v156
    %v265 = vunpack.c.l.b16 %v157
    %v266 = vunpack.c.h.b16 %v157
    %v267 = vunpack.c.l.b16 %v158
    %v268 = vunpack.c.h.b16 %v158
    %v269 = vunpack.c.l.b16 %v159
    %v270 = vunpack.c.h.b16 %v159
    %v271 = vunpack.c.l.b16 %v160
    %v272 = vunpack.c.h.b16 %v160
    %v273 = vpack.c.b16 %v213, %v209
    %v274 = vpack.c.b16 %v214, %v210
    %v275 = vpack.c.b16 %v215, %v211
    %v276 = vpack.c.b16 %v216, %v212
    %v277 = vpack.c.b16 %v221, %v217
    %v278 = vpack.c.b16 %v222, %v218
    %v279 = vpack.c.b16 %v223, %v219
    %v280 = vpack.c.b16 %v224, %v220
    %v281 = vpack.c.b16 %v229, %v225
    %v282 = vpack.c.b16 %v230, %v226
    %v283 = vpack.c.b16 %v231, %v227
    %v284 = vpack.c.b16 %v232, %v228
    %v285 = vpack.c.b16 %v237, %v233
    %v286 = vpack.c.b16 %v238, %v234
    %v287 = vpack.c.b16 %v239, %v235
    %v288 = vpack.c.b16 %v240, %v236
    %v289 = vpack.c.b16 %v245, %v241
    %v290 = vpack.c.b16 %v246, %v242
    %v291 = vpack.c.b16 %v247, %v243
    %v292 = vpack.c.b16 %v248, %v244
    %v293 = vpack.c.b16 %v253, %v249
    %v294 = vpack.c.b16 %v254, %v250
    %v295 = vpack.c.b16 %v255, %v251
    %v296 = vpack.c.b16 %v256, %v252
    %v297 = vpack.c.b16 %v261, %v257
    %v298 = vpack.c.b16 %v262, %v258
    %v299 = vpack.c.b16 %v263, %v259
    %v300 = vpack.c.b16 %v264, %v260
    %v301 = vpack.c.b16 %v269, %v265
    %v302 = vpack.c.b16 %v270, %v266
    %v303 = vpack.c.b16 %v271, %v267
    %v304 = vpack.c.b16 %v272, %v268
    %337 = vmatpush.bf16.msra.mxu0 %v301
    %338 = vmatpush.bf16.msra.mxu0 %v297
    %339 = vmatpush.bf16.msra.mxu0 %v293
    %340 = vmatpush.bf16.msra.mxu0 %v289
    %341 = vmatpush.bf16.msra.mxu0 %v285
    %342 = vmatpush.bf16.msra.mxu0 %v281
    %343 = vmatpush.bf16.msra.mxu0 %v277
    %344 = vmatpush.bf16.msra.mxu0 %v273
    %345 = vmatmul.bf16.gmra.mxu0 %v175
    %v346 = vpop.f32.mrf.mxu0
    %v347 = vadd.f32 %v163, %v346
    %v348 = vpop.f32.mrf.mxu0
    %v349 = vadd.f32 %v163, %v348
    %350 = vdwg.mxu0
    %351 = vmatpush.bf16.msra.mxu0 %v302
    %352 = vmatpush.bf16.msra.mxu0 %v298
    %353 = vmatpush.bf16.msra.mxu0 %v294
    %354 = vmatpush.bf16.msra.mxu0 %v290
    %355 = vmatpush.bf16.msra.mxu0 %v286
    %356 = vmatpush.bf16.msra.mxu0 %v282
    %357 = vmatpush.bf16.msra.mxu0 %v278
    %358 = vmatpush.bf16.msra.mxu0 %v274
    %359 = vmatmul.bf16.gmra.mxu0 %v175
    %v360 = vpop.f32.mrf.mxu0
    %v361 = vadd.f32 %v164, %v360
    %v362 = vpop.f32.mrf.mxu0
    %v363 = vadd.f32 %v164, %v362
    %364 = vdwg.mxu0
    %365 = vmatpush.bf16.msra.mxu0 %v303
    %366 = vmatpush.bf16.msra.mxu0 %v299
    %367 = vmatpush.bf16.msra.mxu0 %v295
    %368 = vmatpush.bf16.msra.mxu0 %v291
    %369 = vmatpush.bf16.msra.mxu0 %v287
    %370 = vmatpush.bf16.msra.mxu0 %v283
    %371 = vmatpush.bf16.msra.mxu0 %v279
    %372 = vmatpush.bf16.msra.mxu0 %v275
    %373 = vmatmul.bf16.gmra.mxu0 %v175
    %v374 = vpop.f32.mrf.mxu0
    %v375 = vadd.f32 %v165, %v374
    %v376 = vpop.f32.mrf.mxu0
    %v377 = vadd.f32 %v165, %v376
    %378 = vdwg.mxu0
    %379 = vmatpush.bf16.msra.mxu0 %v304
    %380 = vmatpush.bf16.msra.mxu0 %v300
    %381 = vmatpush.bf16.msra.mxu0 %v296
    %382 = vmatpush.bf16.msra.mxu0 %v292
    %383 = vmatpush.bf16.msra.mxu0 %v288
    %384 = vmatpush.bf16.msra.mxu0 %v284
    %385 = vmatpush.bf16.msra.mxu0 %v280
    %386 = vmatpush.bf16.msra.mxu0 %v276
    %387 = vmatmul.bf16.gmra.mxu0 %v175
    %v388 = vpop.f32.mrf.mxu0
    %v389 = vadd.f32 %v166, %v388
    %v390 = vpop.f32.mrf.mxu0
    %v391 = vadd.f32 %v166, %v390
    %392 = vdwg.mxu0
    %v393 = vmax.f32 %v347, 0.0
    %v394 = vmax.f32 %v361, 0.0
    %v395 = vmax.f32 %v375, 0.0
    %v396 = vmax.f32 %v389, 0.0
    %v397 = vmax.f32 %v349, 0.0
    %v398 = vmax.f32 %v363, 0.0
    %v399 = vmax.f32 %v377, 0.0
    %v400 = vmax.f32 %v391, 0.0
    %v401 = vpack.c.bf16 %v397, %v393
    %v402 = vpack.c.bf16 %v398, %v394
    %v403 = vpack.c.bf16 %v399, %v395
    %v404 = vpack.c.bf16 %v400, %v396
    %v405 = vld [vmem:[#allocation9] sm:$0xff]
    %v406 = vld [vmem:[#allocation9 + $0x8] sm:$0xff]
    %v407 = vld [vmem:[#allocation9 + $0x10] sm:$0xff]
    %v408 = vld [vmem:[#allocation9 + $0x18] sm:$0xff]
    %v409 = vld [vmem:[#allocation9 + $0x20] sm:$0xff]
    %v410 = vld [vmem:[#allocation9 + $0x28] sm:$0xff]
    %v411 = vld [vmem:[#allocation9 + $0x30] sm:$0xff]
    %v412 = vld [vmem:[#allocation9 + $0x38] sm:$0xff]
    %v413 = vld [vmem:[#allocation9 + $0x40] sm:$0xff]
    %v414 = vld [vmem:[#allocation9 + $0x48] sm:$0xff]
    %v415 = vld [vmem:[#allocation9 + $0x50] sm:$0xff]
    %v416 = vld [vmem:[#allocation9 + $0x58] sm:$0xff]
    %v417 = vld [vmem:[#allocation9 + $0x60] sm:$0xff]
    %v418 = vld [vmem:[#allocation9 + $0x68] sm:$0xff]
    %v419 = vld [vmem:[#allocation9 + $0x70] sm:$0xff]
    %v420 = vld [vmem:[#allocation9 + $0x78] sm:$0xff]
    %v421 = vld [vmem:[#allocation9 + $0x80] sm:$0xff]
    %v422 = vld [vmem:[#allocation9 + $0x88] sm:$0xff]
    %v423 = vld [vmem:[#allocation9 + $0x90] sm:$0xff]
    %v424 = vld [vmem:[#allocation9 + $0x98] sm:$0xff]
    %v425 = vld [vmem:[#allocation9 + $0xa0] sm:$0xff]
    %v426 = vld [vmem:[#allocation9 + $0xa8] sm:$0xff]
    %v427 = vld [vmem:[#allocation9 + $0xb0] sm:$0xff]
    %v428 = vld [vmem:[#allocation9 + $0xb8] sm:$0xff]
    %v429 = vld [vmem:[#allocation9 + $0xc0] sm:$0xff]
    %v430 = vld [vmem:[#allocation9 + $0xc8] sm:$0xff]
    %v431 = vld [vmem:[#allocation9 + $0xd0] sm:$0xff]
    %v432 = vld [vmem:[#allocation9 + $0xd8] sm:$0xff]
    %v433 = vld [vmem:[#allocation9 + $0xe0] sm:$0xff]
    %v434 = vld [vmem:[#allocation9 + $0xe8] sm:$0xff]
    %v435 = vld [vmem:[#allocation9 + $0xf0] sm:$0xff]
    %v436 = vld [vmem:[#allocation9 + $0xf8] sm:$0xff]
    %v437 = vld [vmem:[#allocation9 + $0x100] sm:$0xff]
    %v438 = vld [vmem:[#allocation9 + $0x108] sm:$0xff]
    %v439 = vld [vmem:[#allocation9 + $0x110] sm:$0xff]
    %v440 = vld [vmem:[#allocation9 + $0x118] sm:$0xff]
    %v441 = vld [vmem:[#allocation9 + $0x120] sm:$0xff]
    %v442 = vld [vmem:[#allocation9 + $0x128] sm:$0xff]
    %v443 = vld [vmem:[#allocation9 + $0x130] sm:$0xff]
    %v444 = vld [vmem:[#allocation9 + $0x138] sm:$0xff]
    %v445 = vld [vmem:[#allocation9 + $0x140] sm:$0xff]
    %v446 = vld [vmem:[#allocation9 + $0x148] sm:$0xff]
    %v447 = vld [vmem:[#allocation9 + $0x150] sm:$0xff]
    %v448 = vld [vmem:[#allocation9 + $0x158] sm:$0xff]
    %v449 = vld [vmem:[#allocation9 + $0x160] sm:$0xff]
    %v450 = vld [vmem:[#allocation9 + $0x168] sm:$0xff]
    %v451 = vld [vmem:[#allocation9 + $0x170] sm:$0xff]
    %v452 = vld [vmem:[#allocation9 + $0x178] sm:$0xff]
    %v453 = vld [vmem:[#allocation9 + $0x180] sm:$0xff]
    %v454 = vld [vmem:[#allocation9 + $0x188] sm:$0xff]
    %v455 = vld [vmem:[#allocation9 + $0x190] sm:$0xff]
    %v456 = vld [vmem:[#allocation9 + $0x198] sm:$0xff]
    %v457 = vld [vmem:[#allocation9 + $0x1a0] sm:$0xff]
    %v458 = vld [vmem:[#allocation9 + $0x1a8] sm:$0xff]
    %v459 = vld [vmem:[#allocation9 + $0x1b0] sm:$0xff]
    %v460 = vld [vmem:[#allocation9 + $0x1b8] sm:$0xff]
    %v461 = vld [vmem:[#allocation9 + $0x1c0] sm:$0xff]
    %v462 = vld [vmem:[#allocation9 + $0x1c8] sm:$0xff]
    %v463 = vld [vmem:[#allocation9 + $0x1d0] sm:$0xff]
    %v464 = vld [vmem:[#allocation9 + $0x1d8] sm:$0xff]
    %v465 = vld [vmem:[#allocation9 + $0x1e0] sm:$0xff]
    %v466 = vld [vmem:[#allocation9 + $0x1e8] sm:$0xff]
    %v467 = vld [vmem:[#allocation9 + $0x1f0] sm:$0xff]
    %v468 = vld [vmem:[#allocation9 + $0x1f8] sm:$0xff]
    %v469 = vld [vmem:[#allocation9 + $0x200] sm:$0xff]
    %v470 = vld [vmem:[#allocation9 + $0x208] sm:$0xff]
    %v471 = vld [vmem:[#allocation9 + $0x210] sm:$0xff]
    %v472 = vld [vmem:[#allocation9 + $0x218] sm:$0xff]
    %v473 = vld [vmem:[#allocation9 + $0x220] sm:$0xff]
    %v474 = vld [vmem:[#allocation9 + $0x228] sm:$0xff]
    %v475 = vld [vmem:[#allocation9 + $0x230] sm:$0xff]
    %v476 = vld [vmem:[#allocation9 + $0x238] sm:$0xff]
    %v477 = vld [vmem:[#allocation9 + $0x240] sm:$0xff]
    %v478 = vld [vmem:[#allocation9 + $0x248] sm:$0xff]
    %v479 = vld [vmem:[#allocation9 + $0x250] sm:$0xff]
    %v480 = vld [vmem:[#allocation9 + $0x258] sm:$0xff]
    %v481 = vld [vmem:[#allocation9 + $0x260] sm:$0xff]
    %v482 = vld [vmem:[#allocation9 + $0x268] sm:$0xff]
    %v483 = vld [vmem:[#allocation9 + $0x270] sm:$0xff]
    %v484 = vld [vmem:[#allocation9 + $0x278] sm:$0xff]
    %v485 = vld [vmem:[#allocation9 + $0x280] sm:$0xff]
    %v486 = vld [vmem:[#allocation9 + $0x288] sm:$0xff]
    %v487 = vld [vmem:[#allocation9 + $0x290] sm:$0xff]
    %v488 = vld [vmem:[#allocation9 + $0x298] sm:$0xff]
    %v489 = vld [vmem:[#allocation9 + $0x2a0] sm:$0xff]
    %v490 = vld [vmem:[#allocation9 + $0x2a8] sm:$0xff]
    %v491 = vld [vmem:[#allocation9 + $0x2b0] sm:$0xff]
    %v492 = vld [vmem:[#allocation9 + $0x2b8] sm:$0xff]
    %v493 = vld [vmem:[#allocation9 + $0x2c0] sm:$0xff]
    %v494 = vld [vmem:[#allocation9 + $0x2c8] sm:$0xff]
    %v495 = vld [vmem:[#allocation9 + $0x2d0] sm:$0xff]
    %v496 = vld [vmem:[#allocation9 + $0x2d8] sm:$0xff]
    %v497 = vld [vmem:[#allocation9 + $0x2e0] sm:$0xff]
    %v498 = vld [vmem:[#allocation9 + $0x2e8] sm:$0xff]
    %v499 = vld [vmem:[#allocation9 + $0x2f0] sm:$0xff]
    %v500 = vld [vmem:[#allocation9 + $0x2f8] sm:$0xff]
    %v501 = vld [vmem:[#allocation9 + $0x300] sm:$0xff]
    %v502 = vld [vmem:[#allocation9 + $0x308] sm:$0xff]
    %v503 = vld [vmem:[#allocation9 + $0x310] sm:$0xff]
    %v504 = vld [vmem:[#allocation9 + $0x318] sm:$0xff]
    %v505 = vld [vmem:[#allocation9 + $0x320] sm:$0xff]
    %v506 = vld [vmem:[#allocation9 + $0x328] sm:$0xff]
    %v507 = vld [vmem:[#allocation9 + $0x330] sm:$0xff]
    %v508 = vld [vmem:[#allocation9 + $0x338] sm:$0xff]
    %v509 = vld [vmem:[#allocation9 + $0x340] sm:$0xff]
    %v510 = vld [vmem:[#allocation9 + $0x348] sm:$0xff]
    %v511 = vld [vmem:[#allocation9 + $0x350] sm:$0xff]
    %v512 = vld [vmem:[#allocation9 + $0x358] sm:$0xff]
    %v513 = vld [vmem:[#allocation9 + $0x360] sm:$0xff]
    %v514 = vld [vmem:[#allocation9 + $0x368] sm:$0xff]
    %v515 = vld [vmem:[#allocation9 + $0x370] sm:$0xff]
    %v516 = vld [vmem:[#allocation9 + $0x378] sm:$0xff]
    %v517 = vld [vmem:[#allocation9 + $0x380] sm:$0xff]
    %v518 = vld [vmem:[#allocation9 + $0x388] sm:$0xff]
    %v519 = vld [vmem:[#allocation9 + $0x390] sm:$0xff]
    %v520 = vld [vmem:[#allocation9 + $0x398] sm:$0xff]
    %v521 = vld [vmem:[#allocation9 + $0x3a0] sm:$0xff]
    %v522 = vld [vmem:[#allocation9 + $0x3a8] sm:$0xff]
    %v523 = vld [vmem:[#allocation9 + $0x3b0] sm:$0xff]
    %v524 = vld [vmem:[#allocation9 + $0x3b8] sm:$0xff]
    %v525 = vld [vmem:[#allocation9 + $0x3c0] sm:$0xff]
    %v526 = vld [vmem:[#allocation9 + $0x3c8] sm:$0xff]
    %v527 = vld [vmem:[#allocation9 + $0x3d0] sm:$0xff]
    %v528 = vld [vmem:[#allocation9 + $0x3d8] sm:$0xff]
    %v529 = vld [vmem:[#allocation9 + $0x3e0] sm:$0xff]
    %v530 = vld [vmem:[#allocation9 + $0x3e8] sm:$0xff]
    %v531 = vld [vmem:[#allocation9 + $0x3f0] sm:$0xff]
    %v532 = vld [vmem:[#allocation9 + $0x3f8] sm:$0xff]
    %v533 = vld [vmem:[#allocation11] sm:$0xf]
    %v535 = vperm.slane %v533, 0
    %v536 = vperm.slane %v533, 1
    %v537 = vperm.slane %v533, 2
    %v538 = vperm.slane %v533, 3
    %v671 = vunpack.c.l.b16 %v405
    %v672 = vunpack.c.h.b16 %v405
    %v673 = vunpack.c.l.b16 %v406
    %v674 = vunpack.c.h.b16 %v406
    %v675 = vunpack.c.l.b16 %v407
    %v676 = vunpack.c.h.b16 %v407
    %v677 = vunpack.c.l.b16 %v408
    %v678 = vunpack.c.h.b16 %v408
    %v679 = vunpack.c.l.b16 %v409
    %v680 = vunpack.c.h.b16 %v409
    %v681 = vunpack.c.l.b16 %v410
    %v682 = vunpack.c.h.b16 %v410
    %v683 = vunpack.c.l.b16 %v411
    %v684 = vunpack.c.h.b16 %v411
    %v685 = vunpack.c.l.b16 %v412
    %v686 = vunpack.c.h.b16 %v412
    %v687 = vunpack.c.l.b16 %v413
    %v688 = vunpack.c.h.b16 %v413
    %v689 = vunpack.c.l.b16 %v414
    %v690 = vunpack.c.h.b16 %v414
    %v691 = vunpack.c.l.b16 %v415
    %v692 = vunpack.c.h.b16 %v415
    %v693 = vunpack.c.l.b16 %v416
    %v694 = vunpack.c.h.b16 %v416
    %v695 = vunpack.c.l.b16 %v417
    %v696 = vunpack.c.h.b16 %v417
    %v697 = vunpack.c.l.b16 %v418
    %v698 = vunpack.c.h.b16 %v418
    %v699 = vunpack.c.l.b16 %v419
    %v700 = vunpack.c.h.b16 %v419
    %v701 = vunpack.c.l.b16 %v420
    %v702 = vunpack.c.h.b16 %v420
    %v703 = vunpack.c.l.b16 %v421
    %v704 = vunpack.c.h.b16 %v421
    %v705 = vunpack.c.l.b16 %v422
    %v706 = vunpack.c.h.b16 %v422
    %v707 = vunpack.c.l.b16 %v423
    %v708 = vunpack.c.h.b16 %v423
    %v709 = vunpack.c.l.b16 %v424
    %v710 = vunpack.c.h.b16 %v424
    %v711 = vunpack.c.l.b16 %v425
    %v712 = vunpack.c.h.b16 %v425
    %v713 = vunpack.c.l.b16 %v426
    %v714 = vunpack.c.h.b16 %v426
    %v715 = vunpack.c.l.b16 %v427
    %v716 = vunpack.c.h.b16 %v427
    %v717 = vunpack.c.l.b16 %v428
    %v718 = vunpack.c.h.b16 %v428
    %v719 = vunpack.c.l.b16 %v429
    %v720 = vunpack.c.h.b16 %v429
    %v721 = vunpack.c.l.b16 %v430
    %v722 = vunpack.c.h.b16 %v430
    %v723 = vunpack.c.l.b16 %v431
    %v724 = vunpack.c.h.b16 %v431
    %v725 = vunpack.c.l.b16 %v432
    %v726 = vunpack.c.h.b16 %v432
    %v727 = vunpack.c.l.b16 %v433
    %v728 = vunpack.c.h.b16 %v433
    %v729 = vunpack.c.l.b16 %v434
    %v730 = vunpack.c.h.b16 %v434
    %v731 = vunpack.c.l.b16 %v435
    %v732 = vunpack.c.h.b16 %v435
    %v733 = vunpack.c.l.b16 %v436
    %v734 = vunpack.c.h.b16 %v436
    %v735 = vunpack.c.l.b16 %v437
    %v736 = vunpack.c.h.b16 %v437
    %v737 = vunpack.c.l.b16 %v438
    %v738 = vunpack.c.h.b16 %v438
    %v739 = vunpack.c.l.b16 %v439
    %v740 = vunpack.c.h.b16 %v439
    %v741 = vunpack.c.l.b16 %v440
    %v742 = vunpack.c.h.b16 %v440
    %v743 = vunpack.c.l.b16 %v441
    %v744 = vunpack.c.h.b16 %v441
    %v745 = vunpack.c.l.b16 %v442
    %v746 = vunpack.c.h.b16 %v442
    %v747 = vunpack.c.l.b16 %v443
    %v748 = vunpack.c.h.b16 %v443
    %v749 = vunpack.c.l.b16 %v444
    %v750 = vunpack.c.h.b16 %v444
    %v751 = vunpack.c.l.b16 %v445
    %v752 = vunpack.c.h.b16 %v445
    %v753 = vunpack.c.l.b16 %v446
    %v754 = vunpack.c.h.b16 %v446
    %v755 = vunpack.c.l.b16 %v447
    %v756 = vunpack.c.h.b16 %v447
    %v757 = vunpack.c.l.b16 %v448
    %v758 = vunpack.c.h.b16 %v448
    %v759 = vunpack.c.l.b16 %v449
    %v760 = vunpack.c.h.b16 %v449
    %v761 = vunpack.c.l.b16 %v450
    %v762 = vunpack.c.h.b16 %v450
    %v763 = vunpack.c.l.b16 %v451
    %v764 = vunpack.c.h.b16 %v451
    %v765 = vunpack.c.l.b16 %v452
    %v766 = vunpack.c.h.b16 %v452
    %v767 = vunpack.c.l.b16 %v453
    %v768 = vunpack.c.h.b16 %v453
    %v769 = vunpack.c.l.b16 %v454
    %v770 = vunpack.c.h.b16 %v454
    %v771 = vunpack.c.l.b16 %v455
    %v772 = vunpack.c.h.b16 %v455
    %v773 = vunpack.c.l.b16 %v456
    %v774 = vunpack.c.h.b16 %v456
    %v775 = vunpack.c.l.b16 %v457
    %v776 = vunpack.c.h.b16 %v457
    %v777 = vunpack.c.l.b16 %v458
    %v778 = vunpack.c.h.b16 %v458
    %v779 = vunpack.c.l.b16 %v459
    %v780 = vunpack.c.h.b16 %v459
    %v781 = vunpack.c.l.b16 %v460
    %v782 = vunpack.c.h.b16 %v460
    %v783 = vunpack.c.l.b16 %v461
    %v784 = vunpack.c.h.b16 %v461
    %v785 = vunpack.c.l.b16 %v462
    %v786 = vunpack.c.h.b16 %v462
    %v787 = vunpack.c.l.b16 %v463
    %v788 = vunpack.c.h.b16 %v463
    %v789 = vunpack.c.l.b16 %v464
    %v790 = vunpack.c.h.b16 %v464
    %v791 = vunpack.c.l.b16 %v465
    %v792 = vunpack.c.h.b16 %v465
    %v793 = vunpack.c.l.b16 %v466
    %v794 = vunpack.c.h.b16 %v466
    %v795 = vunpack.c.l.b16 %v467
    %v796 = vunpack.c.h.b16 %v467
    %v797 = vunpack.c.l.b16 %v468
    %v798 = vunpack.c.h.b16 %v468
    %v799 = vunpack.c.l.b16 %v469
    %v800 = vunpack.c.h.b16 %v469
    %v801 = vunpack.c.l.b16 %v470
    %v802 = vunpack.c.h.b16 %v470
    %v803 = vunpack.c.l.b16 %v471
    %v804 = vunpack.c.h.b16 %v471
    %v805 = vunpack.c.l.b16 %v472
    %v806 = vunpack.c.h.b16 %v472
    %v807 = vunpack.c.l.b16 %v473
    %v808 = vunpack.c.h.b16 %v473
    %v809 = vunpack.c.l.b16 %v474
    %v810 = vunpack.c.h.b16 %v474
    %v811 = vunpack.c.l.b16 %v475
    %v812 = vunpack.c.h.b16 %v475
    %v813 = vunpack.c.l.b16 %v476
    %v814 = vunpack.c.h.b16 %v476
    %v815 = vunpack.c.l.b16 %v477
    %v816 = vunpack.c.h.b16 %v477
    %v817 = vunpack.c.l.b16 %v478
    %v818 = vunpack.c.h.b16 %v478
    %v819 = vunpack.c.l.b16 %v479
    %v820 = vunpack.c.h.b16 %v479
    %v821 = vunpack.c.l.b16 %v480
    %v822 = vunpack.c.h.b16 %v480
    %v823 = vunpack.c.l.b16 %v481
    %v824 = vunpack.c.h.b16 %v481
    %v825 = vunpack.c.l.b16 %v482
    %v826 = vunpack.c.h.b16 %v482
    %v827 = vunpack.c.l.b16 %v483
    %v828 = vunpack.c.h.b16 %v483
    %v829 = vunpack.c.l.b16 %v484
    %v830 = vunpack.c.h.b16 %v484
    %v831 = vunpack.c.l.b16 %v485
    %v832 = vunpack.c.h.b16 %v485
    %v833 = vunpack.c.l.b16 %v486
    %v834 = vunpack.c.h.b16 %v486
    %v835 = vunpack.c.l.b16 %v487
    %v836 = vunpack.c.h.b16 %v487
    %v837 = vunpack.c.l.b16 %v488
    %v838 = vunpack.c.h.b16 %v488
    %v839 = vunpack.c.l.b16 %v489
    %v840 = vunpack.c.h.b16 %v489
    %v841 = vunpack.c.l.b16 %v490
    %v842 = vunpack.c.h.b16 %v490
    %v843 = vunpack.c.l.b16 %v491
    %v844 = vunpack.c.h.b16 %v491
    %v845 = vunpack.c.l.b16 %v492
    %v846 = vunpack.c.h.b16 %v492
    %v847 = vunpack.c.l.b16 %v493
    %v848 = vunpack.c.h.b16 %v493
    %v849 = vunpack.c.l.b16 %v494
    %v850 = vunpack.c.h.b16 %v494
    %v851 = vunpack.c.l.b16 %v495
    %v852 = vunpack.c.h.b16 %v495
    %v853 = vunpack.c.l.b16 %v496
    %v854 = vunpack.c.h.b16 %v496
    %v855 = vunpack.c.l.b16 %v497
    %v856 = vunpack.c.h.b16 %v497
    %v857 = vunpack.c.l.b16 %v498
    %v858 = vunpack.c.h.b16 %v498
    %v859 = vunpack.c.l.b16 %v499
    %v860 = vunpack.c.h.b16 %v499
    %v861 = vunpack.c.l.b16 %v500
    %v862 = vunpack.c.h.b16 %v500
    %v863 = vunpack.c.l.b16 %v501
    %v864 = vunpack.c.h.b16 %v501
    %v865 = vunpack.c.l.b16 %v502
    %v866 = vunpack.c.h.b16 %v502
    %v867 = vunpack.c.l.b16 %v503
    %v868 = vunpack.c.h.b16 %v503
    %v869 = vunpack.c.l.b16 %v504
    %v870 = vunpack.c.h.b16 %v504
    %v871 = vunpack.c.l.b16 %v505
    %v872 = vunpack.c.h.b16 %v505
    %v873 = vunpack.c.l.b16 %v506
    %v874 = vunpack.c.h.b16 %v506
    %v875 = vunpack.c.l.b16 %v507
    %v876 = vunpack.c.h.b16 %v507
    %v877 = vunpack.c.l.b16 %v508
    %v878 = vunpack.c.h.b16 %v508
    %v879 = vunpack.c.l.b16 %v509
    %v880 = vunpack.c.h.b16 %v509
    %v881 = vunpack.c.l.b16 %v510
    %v882 = vunpack.c.h.b16 %v510
    %v883 = vunpack.c.l.b16 %v511
    %v884 = vunpack.c.h.b16 %v511
    %v885 = vunpack.c.l.b16 %v512
    %v886 = vunpack.c.h.b16 %v512
    %v887 = vunpack.c.l.b16 %v513
    %v888 = vunpack.c.h.b16 %v513
    %v889 = vunpack.c.l.b16 %v514
    %v890 = vunpack.c.h.b16 %v514
    %v891 = vunpack.c.l.b16 %v515
    %v892 = vunpack.c.h.b16 %v515
    %v893 = vunpack.c.l.b16 %v516
    %v894 = vunpack.c.h.b16 %v516
    %v895 = vunpack.c.l.b16 %v517
    %v896 = vunpack.c.h.b16 %v517
    %v897 = vunpack.c.l.b16 %v518
    %v898 = vunpack.c.h.b16 %v518
    %v899 = vunpack.c.l.b16 %v519
    %v900 = vunpack.c.h.b16 %v519
    %v901 = vunpack.c.l.b16 %v520
    %v902 = vunpack.c.h.b16 %v520
    %v903 = vunpack.c.l.b16 %v521
    %v904 = vunpack.c.h.b16 %v521
    %v905 = vunpack.c.l.b16 %v522
    %v906 = vunpack.c.h.b16 %v522
    %v907 = vunpack.c.l.b16 %v523
    %v908 = vunpack.c.h.b16 %v523
    %v909 = vunpack.c.l.b16 %v524
    %v910 = vunpack.c.h.b16 %v524
    %v911 = vunpack.c.l.b16 %v525
    %v912 = vunpack.c.h.b16 %v525
    %v913 = vunpack.c.l.b16 %v526
    %v914 = vunpack.c.h.b16 %v526
    %v915 = vunpack.c.l.b16 %v527
    %v916 = vunpack.c.h.b16 %v527
    %v917 = vunpack.c.l.b16 %v528
    %v918 = vunpack.c.h.b16 %v528
    %v919 = vunpack.c.l.b16 %v529
    %v920 = vunpack.c.h.b16 %v529
    %v921 = vunpack.c.l.b16 %v530
    %v922 = vunpack.c.h.b16 %v530
    %v923 = vunpack.c.l.b16 %v531
    %v924 = vunpack.c.h.b16 %v531
    %v925 = vunpack.c.l.b16 %v532
    %v926 = vunpack.c.h.b16 %v532
    %v927 = vpack.c.b16 %v675, %v671
    %v928 = vpack.c.b16 %v676, %v672
    %v929 = vpack.c.b16 %v677, %v673
    %v930 = vpack.c.b16 %v678, %v674
    %v931 = vpack.c.b16 %v683, %v679
    %v932 = vpack.c.b16 %v684, %v680
    %v933 = vpack.c.b16 %v685, %v681
    %v934 = vpack.c.b16 %v686, %v682
    %v935 = vpack.c.b16 %v691, %v687
    %v936 = vpack.c.b16 %v692, %v688
    %v937 = vpack.c.b16 %v693, %v689
    %v938 = vpack.c.b16 %v694, %v690
    %v939 = vpack.c.b16 %v699, %v695
    %v940 = vpack.c.b16 %v700, %v696
    %v941 = vpack.c.b16 %v701, %v697
    %v942 = vpack.c.b16 %v702, %v698
    %v943 = vpack.c.b16 %v707, %v703
    %v944 = vpack.c.b16 %v708, %v704
    %v945 = vpack.c.b16 %v709, %v705
    %v946 = vpack.c.b16 %v710, %v706
    %v947 = vpack.c.b16 %v715, %v711
    %v948 = vpack.c.b16 %v716, %v712
    %v949 = vpack.c.b16 %v717, %v713
    %v950 = vpack.c.b16 %v718, %v714
    %v951 = vpack.c.b16 %v723, %v719
    %v952 = vpack.c.b16 %v724, %v720
    %v953 = vpack.c.b16 %v725, %v721
    %v954 = vpack.c.b16 %v726, %v722
    %v955 = vpack.c.b16 %v731, %v727
    %v956 = vpack.c.b16 %v732, %v728
    %v957 = vpack.c.b16 %v733, %v729
    %v958 = vpack.c.b16 %v734, %v730
    %v959 = vpack.c.b16 %v739, %v735
    %v960 = vpack.c.b16 %v740, %v736
    %v961 = vpack.c.b16 %v741, %v737
    %v962 = vpack.c.b16 %v742, %v738
    %v963 = vpack.c.b16 %v747, %v743
    %v964 = vpack.c.b16 %v748, %v744
    %v965 = vpack.c.b16 %v749, %v745
    %v966 = vpack.c.b16 %v750, %v746
    %v967 = vpack.c.b16 %v755, %v751
    %v968 = vpack.c.b16 %v756, %v752
    %v969 = vpack.c.b16 %v757, %v753
    %v970 = vpack.c.b16 %v758, %v754
    %v971 = vpack.c.b16 %v763, %v759
    %v972 = vpack.c.b16 %v764, %v760
    %v973 = vpack.c.b16 %v765, %v761
    %v974 = vpack.c.b16 %v766, %v762
    %v975 = vpack.c.b16 %v771, %v767
    %v976 = vpack.c.b16 %v772, %v768
    %v977 = vpack.c.b16 %v773, %v769
    %v978 = vpack.c.b16 %v774, %v770
    %v979 = vpack.c.b16 %v779, %v775
    %v980 = vpack.c.b16 %v780, %v776
    %v981 = vpack.c.b16 %v781, %v777
    %v982 = vpack.c.b16 %v782, %v778
    %v983 = vpack.c.b16 %v787, %v783
    %v984 = vpack.c.b16 %v788, %v784
    %v985 = vpack.c.b16 %v789, %v785
    %v986 = vpack.c.b16 %v790, %v786
    %v987 = vpack.c.b16 %v795, %v791
    %v988 = vpack.c.b16 %v796, %v792
    %v989 = vpack.c.b16 %v797, %v793
    %v990 = vpack.c.b16 %v798, %v794
    %v991 = vpack.c.b16 %v803, %v799
    %v992 = vpack.c.b16 %v804, %v800
    %v993 = vpack.c.b16 %v805, %v801
    %v994 = vpack.c.b16 %v806, %v802
    %v995 = vpack.c.b16 %v811, %v807
    %v996 = vpack.c.b16 %v812, %v808
    %v997 = vpack.c.b16 %v813, %v809
    %v998 = vpack.c.b16 %v814, %v810
    %v999 = vpack.c.b16 %v819, %v815
    %v1000 = vpack.c.b16 %v820, %v816
    %v1001 = vpack.c.b16 %v821, %v817
    %v1002 = vpack.c.b16 %v822, %v818
    %v1003 = vpack.c.b16 %v827, %v823
    %v1004 = vpack.c.b16 %v828, %v824
    %v1005 = vpack.c.b16 %v829, %v825
    %v1006 = vpack.c.b16 %v830, %v826
    %v1007 = vpack.c.b16 %v835, %v831
    %v1008 = vpack.c.b16 %v836, %v832
    %v1009 = vpack.c.b16 %v837, %v833
    %v1010 = vpack.c.b16 %v838, %v834
    %v1011 = vpack.c.b16 %v843, %v839
    %v1012 = vpack.c.b16 %v844, %v840
    %v1013 = vpack.c.b16 %v845, %v841
    %v1014 = vpack.c.b16 %v846, %v842
    %v1015 = vpack.c.b16 %v851, %v847
    %v1016 = vpack.c.b16 %v852, %v848
    %v1017 = vpack.c.b16 %v853, %v849
    %v1018 = vpack.c.b16 %v854, %v850
    %v1019 = vpack.c.b16 %v859, %v855
    %v1020 = vpack.c.b16 %v860, %v856
    %v1021 = vpack.c.b16 %v861, %v857
    %v1022 = vpack.c.b16 %v862, %v858
    %v1023 = vpack.c.b16 %v867, %v863
    %v1024 = vpack.c.b16 %v868, %v864
    %v1025 = vpack.c.b16 %v869, %v865
    %v1026 = vpack.c.b16 %v870, %v866
    %v1027 = vpack.c.b16 %v875, %v871
    %v1028 = vpack.c.b16 %v876, %v872
    %v1029 = vpack.c.b16 %v877, %v873
    %v1030 = vpack.c.b16 %v878, %v874
    %v1031 = vpack.c.b16 %v883, %v879
    %v1032 = vpack.c.b16 %v884, %v880
    %v1033 = vpack.c.b16 %v885, %v881
    %v1034 = vpack.c.b16 %v886, %v882
    %v1035 = vpack.c.b16 %v891, %v887
    %v1036 = vpack.c.b16 %v892, %v888
    %v1037 = vpack.c.b16 %v893, %v889
    %v1038 = vpack.c.b16 %v894, %v890
    %v1039 = vpack.c.b16 %v899, %v895
    %v1040 = vpack.c.b16 %v900, %v896
    %v1041 = vpack.c.b16 %v901, %v897
    %v1042 = vpack.c.b16 %v902, %v898
    %v1043 = vpack.c.b16 %v907, %v903
    %v1044 = vpack.c.b16 %v908, %v904
    %v1045 = vpack.c.b16 %v909, %v905
    %v1046 = vpack.c.b16 %v910, %v906
    %v1047 = vpack.c.b16 %v915, %v911
    %v1048 = vpack.c.b16 %v916, %v912
    %v1049 = vpack.c.b16 %v917, %v913
    %v1050 = vpack.c.b16 %v918, %v914
    %v1051 = vpack.c.b16 %v923, %v919
    %v1052 = vpack.c.b16 %v924, %v920
    %v1053 = vpack.c.b16 %v925, %v921
    %v1054 = vpack.c.b16 %v926, %v922
    %1183 = vmatpush.bf16.msra.mxu0 %v955
    %1184 = vmatpush.bf16.msra.mxu0 %v951
    %1185 = vmatpush.bf16.msra.mxu0 %v947
    %1186 = vmatpush.bf16.msra.mxu0 %v943
    %1187 = vmatpush.bf16.msra.mxu0 %v939
    %1188 = vmatpush.bf16.msra.mxu0 %v935
    %1189 = vmatpush.bf16.msra.mxu0 %v931
    %1190 = vmatpush.bf16.msra.mxu0 %v927
    %1191 = vmatmul.bf16.gmra.mxu0 %v401
    %v1192 = vpop.f32.mrf.mxu0
    %v1193 = vadd.f32 %v535, %v1192
    %v1194 = vpop.f32.mrf.mxu0
    %v1195 = vadd.f32 %v535, %v1194
    %1196 = vdwg.mxu0
    %1197 = vmatpush.bf16.msra.mxu0 %v987
    %1198 = vmatpush.bf16.msra.mxu0 %v983
    %1199 = vmatpush.bf16.msra.mxu0 %v979
    %1200 = vmatpush.bf16.msra.mxu0 %v975
    %1201 = vmatpush.bf16.msra.mxu0 %v971
    %1202 = vmatpush.bf16.msra.mxu0 %v967
    %1203 = vmatpush.bf16.msra.mxu0 %v963
    %1204 = vmatpush.bf16.msra.mxu0 %v959
    %1205 = vmatmul.bf16.gmra.mxu0 %v402
    %v1206 = vpop.f32.mrf.mxu0
    %v1207 = vadd.f32 %v1193, %v1206
    %v1208 = vpop.f32.mrf.mxu0
    %v1209 = vadd.f32 %v1195, %v1208
    %1210 = vdwg.mxu0
    %1211 = vmatpush.bf16.msra.mxu0 %v1019
    %1212 = vmatpush.bf16.msra.mxu0 %v1015
    %1213 = vmatpush.bf16.msra.mxu0 %v1011
    %1214 = vmatpush.bf16.msra.mxu0 %v1007
    %1215 = vmatpush.bf16.msra.mxu0 %v1003
    %1216 = vmatpush.bf16.msra.mxu0 %v999
    %1217 = vmatpush.bf16.msra.mxu0 %v995
    %1218 = vmatpush.bf16.msra.mxu0 %v991
    %1219 = vmatmul.bf16.gmra.mxu0 %v403
    %v1220 = vpop.f32.mrf.mxu0
    %v1221 = vadd.f32 %v1207, %v1220
    %v1222 = vpop.f32.mrf.mxu0
    %v1223 = vadd.f32 %v1209, %v1222
    %1224 = vdwg.mxu0
    %1225 = vmatpush.bf16.msra.mxu0 %v1051
    %1226 = vmatpush.bf16.msra.mxu0 %v1047
    %1227 = vmatpush.bf16.msra.mxu0 %v1043
    %1228 = vmatpush.bf16.msra.mxu0 %v1039
    %1229 = vmatpush.bf16.msra.mxu0 %v1035
    %1230 = vmatpush.bf16.msra.mxu0 %v1031
    %1231 = vmatpush.bf16.msra.mxu0 %v1027
    %1232 = vmatpush.bf16.msra.mxu0 %v1023
    %1233 = vmatmul.bf16.gmra.mxu0 %v404
    %v1234 = vpop.f32.mrf.mxu0
    %v1235 = vadd.f32 %v1221, %v1234
    %v1236 = vpop.f32.mrf.mxu0
    %v1237 = vadd.f32 %v1223, %v1236
    %1238 = vdwg.mxu0
    %1239 = vmatpush.bf16.msra.mxu0 %v956
    %1240 = vmatpush.bf16.msra.mxu0 %v952
    %1241 = vmatpush.bf16.msra.mxu0 %v948
    %1242 = vmatpush.bf16.msra.mxu0 %v944
    %1243 = vmatpush.bf16.msra.mxu0 %v940
    %1244 = vmatpush.bf16.msra.mxu0 %v936
    %1245 = vmatpush.bf16.msra.mxu0 %v932
    %1246 = vmatpush.bf16.msra.mxu0 %v928
    %1247 = vmatmul.bf16.gmra.mxu0 %v401
    %v1248 = vpop.f32.mrf.mxu0
    %v1249 = vadd.f32 %v536, %v1248
    %v1250 = vpop.f32.mrf.mxu0
    %v1251 = vadd.f32 %v536, %v1250
    %1252 = vdwg.mxu0
    %1253 = vmatpush.bf16.msra.mxu0 %v988
    %1254 = vmatpush.bf16.msra.mxu0 %v984
    %1255 = vmatpush.bf16.msra.mxu0 %v980
    %1256 = vmatpush.bf16.msra.mxu0 %v976
    %1257 = vmatpush.bf16.msra.mxu0 %v972
    %1258 = vmatpush.bf16.msra.mxu0 %v968
    %1259 = vmatpush.bf16.msra.mxu0 %v964
    %1260 = vmatpush.bf16.msra.mxu0 %v960
    %1261 = vmatmul.bf16.gmra.mxu0 %v402
    %v1262 = vpop.f32.mrf.mxu0
    %v1263 = vadd.f32 %v1249, %v1262
    %v1264 = vpop.f32.mrf.mxu0
    %v1265 = vadd.f32 %v1251, %v1264
    %1266 = vdwg.mxu0
    %1267 = vmatpush.bf16.msra.mxu0 %v1020
    %1268 = vmatpush.bf16.msra.mxu0 %v1016
    %1269 = vmatpush.bf16.msra.mxu0 %v1012
    %1270 = vmatpush.bf16.msra.mxu0 %v1008
    %1271 = vmatpush.bf16.msra.mxu0 %v1004
    %1272 = vmatpush.bf16.msra.mxu0 %v1000
    %1273 = vmatpush.bf16.msra.mxu0 %v996
    %1274 = vmatpush.bf16.msra.mxu0 %v992
    %1275 = vmatmul.bf16.gmra.mxu0 %v403
    %v1276 = vpop.f32.mrf.mxu0
    %v1277 = vadd.f32 %v1263, %v1276
    %v1278 = vpop.f32.mrf.mxu0
    %v1279 = vadd.f32 %v1265, %v1278
    %1280 = vdwg.mxu0
    %1281 = vmatpush.bf16.msra.mxu0 %v1052
    %1282 = vmatpush.bf16.msra.mxu0 %v1048
    %1283 = vmatpush.bf16.msra.mxu0 %v1044
    %1284 = vmatpush.bf16.msra.mxu0 %v1040
    %1285 = vmatpush.bf16.msra.mxu0 %v1036
    %1286 = vmatpush.bf16.msra.mxu0 %v1032
    %1287 = vmatpush.bf16.msra.mxu0 %v1028
    %1288 = vmatpush.bf16.msra.mxu0 %v1024
    %1289 = vmatmul.bf16.gmra.mxu0 %v404
    %v1290 = vpop.f32.mrf.mxu0
    %v1291 = vadd.f32 %v1277, %v1290
    %v1292 = vpop.f32.mrf.mxu0
    %v1293 = vadd.f32 %v1279, %v1292
    %1294 = vdwg.mxu0
    %1295 = vmatpush.bf16.msra.mxu0 %v957
    %1296 = vmatpush.bf16.msra.mxu0 %v953
    %1297 = vmatpush.bf16.msra.mxu0 %v949
    %1298 = vmatpush.bf16.msra.mxu0 %v945
    %1299 = vmatpush.bf16.msra.mxu0 %v941
    %1300 = vmatpush.bf16.msra.mxu0 %v937
    %1301 = vmatpush.bf16.msra.mxu0 %v933
    %1302 = vmatpush.bf16.msra.mxu0 %v929
    %1303 = vmatmul.bf16.gmra.mxu0 %v401
    %v1304 = vpop.f32.mrf.mxu0
    %v1305 = vadd.f32 %v537, %v1304
    %v1306 = vpop.f32.mrf.mxu0
    %v1307 = vadd.f32 %v537, %v1306
    %1308 = vdwg.mxu0
    %1309 = vmatpush.bf16.msra.mxu0 %v989
    %1310 = vmatpush.bf16.msra.mxu0 %v985
    %1311 = vmatpush.bf16.msra.mxu0 %v981
    %1312 = vmatpush.bf16.msra.mxu0 %v977
    %1313 = vmatpush.bf16.msra.mxu0 %v973
    %1314 = vmatpush.bf16.msra.mxu0 %v969
    %1315 = vmatpush.bf16.msra.mxu0 %v965
    %1316 = vmatpush.bf16.msra.mxu0 %v961
    %1317 = vmatmul.bf16.gmra.mxu0 %v402
    %v1318 = vpop.f32.mrf.mxu0
    %v1319 = vadd.f32 %v1305, %v1318
    %v1320 = vpop.f32.mrf.mxu0
    %v1321 = vadd.f32 %v1307, %v1320
    %1322 = vdwg.mxu0
    %1323 = vmatpush.bf16.msra.mxu0 %v1021
    %1324 = vmatpush.bf16.msra.mxu0 %v1017
    %1325 = vmatpush.bf16.msra.mxu0 %v1013
    %1326 = vmatpush.bf16.msra.mxu0 %v1009
    %1327 = vmatpush.bf16.msra.mxu0 %v1005
    %1328 = vmatpush.bf16.msra.mxu0 %v1001
    %1329 = vmatpush.bf16.msra.mxu0 %v997
    %1330 = vmatpush.bf16.msra.mxu0 %v993
    %1331 = vmatmul.bf16.gmra.mxu0 %v403
    %v1332 = vpop.f32.mrf.mxu0
    %v1333 = vadd.f32 %v1319, %v1332
    %v1334 = vpop.f32.mrf.mxu0
    %v1335 = vadd.f32 %v1321, %v1334
    %1336 = vdwg.mxu0
    %1337 = vmatpush.bf16.msra.mxu0 %v1053
    %1338 = vmatpush.bf16.msra.mxu0 %v1049
    %1339 = vmatpush.bf16.msra.mxu0 %v1045
    %1340 = vmatpush.bf16.msra.mxu0 %v1041
    %1341 = vmatpush.bf16.msra.mxu0 %v1037
    %1342 = vmatpush.bf16.msra.mxu0 %v1033
    %1343 = vmatpush.bf16.msra.mxu0 %v1029
    %1344 = vmatpush.bf16.msra.mxu0 %v1025
    %1345 = vmatmul.bf16.gmra.mxu0 %v404
    %v1346 = vpop.f32.mrf.mxu0
    %v1347 = vadd.f32 %v1333, %v1346
    %v1348 = vpop.f32.mrf.mxu0
    %v1349 = vadd.f32 %v1335, %v1348
    %1350 = vdwg.mxu0
    %1351 = vmatpush.bf16.msra.mxu0 %v958
    %1352 = vmatpush.bf16.msra.mxu0 %v954
    %1353 = vmatpush.bf16.msra.mxu0 %v950
    %1354 = vmatpush.bf16.msra.mxu0 %v946
    %1355 = vmatpush.bf16.msra.mxu0 %v942
    %1356 = vmatpush.bf16.msra.mxu0 %v938
    %1357 = vmatpush.bf16.msra.mxu0 %v934
    %1358 = vmatpush.bf16.msra.mxu0 %v930
    %1359 = vmatmul.bf16.gmra.mxu0 %v401
    %v1360 = vpop.f32.mrf.mxu0
    %v1361 = vadd.f32 %v538, %v1360
    %v1362 = vpop.f32.mrf.mxu0
    %v1363 = vadd.f32 %v538, %v1362
    %1364 = vdwg.mxu0
    %1365 = vmatpush.bf16.msra.mxu0 %v990
    %1366 = vmatpush.bf16.msra.mxu0 %v986
    %1367 = vmatpush.bf16.msra.mxu0 %v982
    %1368 = vmatpush.bf16.msra.mxu0 %v978
    %1369 = vmatpush.bf16.msra.mxu0 %v974
    %1370 = vmatpush.bf16.msra.mxu0 %v970
    %1371 = vmatpush.bf16.msra.mxu0 %v966
    %1372 = vmatpush.bf16.msra.mxu0 %v962
    %1373 = vmatmul.bf16.gmra.mxu0 %v402
    %v1374 = vpop.f32.mrf.mxu0
    %v1375 = vadd.f32 %v1361, %v1374
    %v1376 = vpop.f32.mrf.mxu0
    %v1377 = vadd.f32 %v1363, %v1376
    %1378 = vdwg.mxu0
    %1379 = vmatpush.bf16.msra.mxu0 %v1022
    %1380 = vmatpush.bf16.msra.mxu0 %v1018
    %1381 = vmatpush.bf16.msra.mxu0 %v1014
    %1382 = vmatpush.bf16.msra.mxu0 %v1010
    %1383 = vmatpush.bf16.msra.mxu0 %v1006
    %1384 = vmatpush.bf16.msra.mxu0 %v1002
    %1385 = vmatpush.bf16.msra.mxu0 %v998
    %1386 = vmatpush.bf16.msra.mxu0 %v994
    %1387 = vmatmul.bf16.gmra.mxu0 %v403
    %v1388 = vpop.f32.mrf.mxu0
    %v1389 = vadd.f32 %v1375, %v1388
    %v1390 = vpop.f32.mrf.mxu0
    %v1391 = vadd.f32 %v1377, %v1390
    %1392 = vdwg.mxu0
    %1393 = vmatpush.bf16.msra.mxu0 %v1054
    %1394 = vmatpush.bf16.msra.mxu0 %v1050
    %1395 = vmatpush.bf16.msra.mxu0 %v1046
    %1396 = vmatpush.bf16.msra.mxu0 %v1042
    %1397 = vmatpush.bf16.msra.mxu0 %v1038
    %1398 = vmatpush.bf16.msra.mxu0 %v1034
    %1399 = vmatpush.bf16.msra.mxu0 %v1030
    %1400 = vmatpush.bf16.msra.mxu0 %v1026
    %1401 = vmatmul.bf16.gmra.mxu0 %v404
    %v1402 = vpop.f32.mrf.mxu0
    %v1403 = vadd.f32 %v1389, %v1402
    %v1404 = vpop.f32.mrf.mxu0
    %v1405 = vadd.f32 %v1391, %v1404
    %1406 = vdwg.mxu0
    %v1407 = vmax.f32 %v1235, 0.0
    %v1408 = vmax.f32 %v1291, 0.0
    %v1409 = vmax.f32 %v1347, 0.0
    %v1410 = vmax.f32 %v1403, 0.0
    %v1411 = vmax.f32 %v1237, 0.0
    %v1412 = vmax.f32 %v1293, 0.0
    %v1413 = vmax.f32 %v1349, 0.0
    %v1414 = vmax.f32 %v1405, 0.0
    %v1415 = vpack.c.bf16 %v1411, %v1407
    %v1416 = vpack.c.bf16 %v1412, %v1408
    %v1417 = vpack.c.bf16 %v1413, %v1409
    %v1418 = vpack.c.bf16 %v1414, %v1410
    %v1419 = vld [vmem:[#allocation12] sm:$0xff]
    %v1420 = vld [vmem:[#allocation12 + $0x8] sm:$0xff]
    %v1421 = vld [vmem:[#allocation12 + $0x10] sm:$0xff]
    %v1422 = vld [vmem:[#allocation12 + $0x18] sm:$0xff]
    %v1423 = vld [vmem:[#allocation12 + $0x20] sm:$0xff]
    %v1424 = vld [vmem:[#allocation12 + $0x28] sm:$0xff]
    %v1425 = vld [vmem:[#allocation12 + $0x30] sm:$0xff]
    %v1426 = vld [vmem:[#allocation12 + $0x38] sm:$0xff]
    %v1427 = vld [vmem:[#allocation12 + $0x40] sm:$0xff]
    %v1428 = vld [vmem:[#allocation12 + $0x48] sm:$0xff]
    %v1429 = vld [vmem:[#allocation12 + $0x50] sm:$0xff]
    %v1430 = vld [vmem:[#allocation12 + $0x58] sm:$0xff]
    %v1431 = vld [vmem:[#allocation12 + $0x60] sm:$0xff]
    %v1432 = vld [vmem:[#allocation12 + $0x68] sm:$0xff]
    %v1433 = vld [vmem:[#allocation12 + $0x70] sm:$0xff]
    %v1434 = vld [vmem:[#allocation12 + $0x78] sm:$0xff]
    %v1435 = vld [vmem:[#allocation12 + $0x80] sm:$0xff]
    %v1436 = vld [vmem:[#allocation12 + $0x88] sm:$0xff]
    %v1437 = vld [vmem:[#allocation12 + $0x90] sm:$0xff]
    %v1438 = vld [vmem:[#allocation12 + $0x98] sm:$0xff]
    %v1439 = vld [vmem:[#allocation12 + $0xa0] sm:$0xff]
    %v1440 = vld [vmem:[#allocation12 + $0xa8] sm:$0xff]
    %v1441 = vld [vmem:[#allocation12 + $0xb0] sm:$0xff]
    %v1442 = vld [vmem:[#allocation12 + $0xb8] sm:$0xff]
    %v1443 = vld [vmem:[#allocation12 + $0xc0] sm:$0xff]
    %v1444 = vld [vmem:[#allocation12 + $0xc8] sm:$0xff]
    %v1445 = vld [vmem:[#allocation12 + $0xd0] sm:$0xff]
    %v1446 = vld [vmem:[#allocation12 + $0xd8] sm:$0xff]
    %v1447 = vld [vmem:[#allocation12 + $0xe0] sm:$0xff]
    %v1448 = vld [vmem:[#allocation12 + $0xe8] sm:$0xff]
    %v1449 = vld [vmem:[#allocation12 + $0xf0] sm:$0xff]
    %v1450 = vld [vmem:[#allocation12 + $0xf8] sm:$0xff]
    %v1451 = vld [vmem:[#allocation12 + $0x100] sm:$0xff]
    %v1452 = vld [vmem:[#allocation12 + $0x108] sm:$0xff]
    %v1453 = vld [vmem:[#allocation12 + $0x110] sm:$0xff]
    %v1454 = vld [vmem:[#allocation12 + $0x118] sm:$0xff]
    %v1455 = vld [vmem:[#allocation12 + $0x120] sm:$0xff]
    %v1456 = vld [vmem:[#allocation12 + $0x128] sm:$0xff]
    %v1457 = vld [vmem:[#allocation12 + $0x130] sm:$0xff]
    %v1458 = vld [vmem:[#allocation12 + $0x138] sm:$0xff]
    %v1459 = vld [vmem:[#allocation12 + $0x140] sm:$0xff]
    %v1460 = vld [vmem:[#allocation12 + $0x148] sm:$0xff]
    %v1461 = vld [vmem:[#allocation12 + $0x150] sm:$0xff]
    %v1462 = vld [vmem:[#allocation12 + $0x158] sm:$0xff]
    %v1463 = vld [vmem:[#allocation12 + $0x160] sm:$0xff]
    %v1464 = vld [vmem:[#allocation12 + $0x168] sm:$0xff]
    %v1465 = vld [vmem:[#allocation12 + $0x170] sm:$0xff]
    %v1466 = vld [vmem:[#allocation12 + $0x178] sm:$0xff]
    %v1467 = vld [vmem:[#allocation12 + $0x180] sm:$0xff]
    %v1468 = vld [vmem:[#allocation12 + $0x188] sm:$0xff]
    %v1469 = vld [vmem:[#allocation12 + $0x190] sm:$0xff]
    %v1470 = vld [vmem:[#allocation12 + $0x198] sm:$0xff]
    %v1471 = vld [vmem:[#allocation12 + $0x1a0] sm:$0xff]
    %v1472 = vld [vmem:[#allocation12 + $0x1a8] sm:$0xff]
    %v1473 = vld [vmem:[#allocation12 + $0x1b0] sm:$0xff]
    %v1474 = vld [vmem:[#allocation12 + $0x1b8] sm:$0xff]
    %v1475 = vld [vmem:[#allocation12 + $0x1c0] sm:$0xff]
    %v1476 = vld [vmem:[#allocation12 + $0x1c8] sm:$0xff]
    %v1477 = vld [vmem:[#allocation12 + $0x1d0] sm:$0xff]
    %v1478 = vld [vmem:[#allocation12 + $0x1d8] sm:$0xff]
    %v1479 = vld [vmem:[#allocation12 + $0x1e0] sm:$0xff]
    %v1480 = vld [vmem:[#allocation12 + $0x1e8] sm:$0xff]
    %v1481 = vld [vmem:[#allocation12 + $0x1f0] sm:$0xff]
    %v1482 = vld [vmem:[#allocation12 + $0x1f8] sm:$0xff]
    %v1483 = vld [vmem:[#allocation12 + $0x200] sm:$0xff]
    %v1484 = vld [vmem:[#allocation12 + $0x208] sm:$0xff]
    %v1485 = vld [vmem:[#allocation12 + $0x210] sm:$0xff]
    %v1486 = vld [vmem:[#allocation12 + $0x218] sm:$0xff]
    %v1487 = vld [vmem:[#allocation12 + $0x220] sm:$0xff]
    %v1488 = vld [vmem:[#allocation12 + $0x228] sm:$0xff]
    %v1489 = vld [vmem:[#allocation12 + $0x230] sm:$0xff]
    %v1490 = vld [vmem:[#allocation12 + $0x238] sm:$0xff]
    %v1491 = vld [vmem:[#allocation12 + $0x240] sm:$0xff]
    %v1492 = vld [vmem:[#allocation12 + $0x248] sm:$0xff]
    %v1493 = vld [vmem:[#allocation12 + $0x250] sm:$0xff]
    %v1494 = vld [vmem:[#allocation12 + $0x258] sm:$0xff]
    %v1495 = vld [vmem:[#allocation12 + $0x260] sm:$0xff]
    %v1496 = vld [vmem:[#allocation12 + $0x268] sm:$0xff]
    %v1497 = vld [vmem:[#allocation12 + $0x270] sm:$0xff]
    %v1498 = vld [vmem:[#allocation12 + $0x278] sm:$0xff]
    %v1499 = vld [vmem:[#allocation12 + $0x280] sm:$0xff]
    %v1500 = vld [vmem:[#allocation12 + $0x288] sm:$0xff]
    %v1501 = vld [vmem:[#allocation12 + $0x290] sm:$0xff]
    %v1502 = vld [vmem:[#allocation12 + $0x298] sm:$0xff]
    %v1503 = vld [vmem:[#allocation12 + $0x2a0] sm:$0xff]
    %v1504 = vld [vmem:[#allocation12 + $0x2a8] sm:$0xff]
    %v1505 = vld [vmem:[#allocation12 + $0x2b0] sm:$0xff]
    %v1506 = vld [vmem:[#allocation12 + $0x2b8] sm:$0xff]
    %v1507 = vld [vmem:[#allocation12 + $0x2c0] sm:$0xff]
    %v1508 = vld [vmem:[#allocation12 + $0x2c8] sm:$0xff]
    %v1509 = vld [vmem:[#allocation12 + $0x2d0] sm:$0xff]
    %v1510 = vld [vmem:[#allocation12 + $0x2d8] sm:$0xff]
    %v1511 = vld [vmem:[#allocation12 + $0x2e0] sm:$0xff]
    %v1512 = vld [vmem:[#allocation12 + $0x2e8] sm:$0xff]
    %v1513 = vld [vmem:[#allocation12 + $0x2f0] sm:$0xff]
    %v1514 = vld [vmem:[#allocation12 + $0x2f8] sm:$0xff]
    %v1515 = vld [vmem:[#allocation12 + $0x300] sm:$0xff]
    %v1516 = vld [vmem:[#allocation12 + $0x308] sm:$0xff]
    %v1517 = vld [vmem:[#allocation12 + $0x310] sm:$0xff]
    %v1518 = vld [vmem:[#allocation12 + $0x318] sm:$0xff]
    %v1519 = vld [vmem:[#allocation12 + $0x320] sm:$0xff]
    %v1520 = vld [vmem:[#allocation12 + $0x328] sm:$0xff]
    %v1521 = vld [vmem:[#allocation12 + $0x330] sm:$0xff]
    %v1522 = vld [vmem:[#allocation12 + $0x338] sm:$0xff]
    %v1523 = vld [vmem:[#allocation12 + $0x340] sm:$0xff]
    %v1524 = vld [vmem:[#allocation12 + $0x348] sm:$0xff]
    %v1525 = vld [vmem:[#allocation12 + $0x350] sm:$0xff]
    %v1526 = vld [vmem:[#allocation12 + $0x358] sm:$0xff]
    %v1527 = vld [vmem:[#allocation12 + $0x360] sm:$0xff]
    %v1528 = vld [vmem:[#allocation12 + $0x368] sm:$0xff]
    %v1529 = vld [vmem:[#allocation12 + $0x370] sm:$0xff]
    %v1530 = vld [vmem:[#allocation12 + $0x378] sm:$0xff]
    %v1531 = vld [vmem:[#allocation12 + $0x380] sm:$0xff]
    %v1532 = vld [vmem:[#allocation12 + $0x388] sm:$0xff]
    %v1533 = vld [vmem:[#allocation12 + $0x390] sm:$0xff]
    %v1534 = vld [vmem:[#allocation12 + $0x398] sm:$0xff]
    %v1535 = vld [vmem:[#allocation12 + $0x3a0] sm:$0xff]
    %v1536 = vld [vmem:[#allocation12 + $0x3a8] sm:$0xff]
    %v1537 = vld [vmem:[#allocation12 + $0x3b0] sm:$0xff]
    %v1538 = vld [vmem:[#allocation12 + $0x3b8] sm:$0xff]
    %v1539 = vld [vmem:[#allocation12 + $0x3c0] sm:$0xff]
    %v1540 = vld [vmem:[#allocation12 + $0x3c8] sm:$0xff]
    %v1541 = vld [vmem:[#allocation12 + $0x3d0] sm:$0xff]
    %v1542 = vld [vmem:[#allocation12 + $0x3d8] sm:$0xff]
    %v1543 = vld [vmem:[#allocation12 + $0x3e0] sm:$0xff]
    %v1544 = vld [vmem:[#allocation12 + $0x3e8] sm:$0xff]
    %v1545 = vld [vmem:[#allocation12 + $0x3f0] sm:$0xff]
    %v1546 = vld [vmem:[#allocation12 + $0x3f8] sm:$0xff]
    %v1547 = vld [vmem:[%s6] sm:$0xf]
    %v1549 = vperm.slane %v1547, 0
    %v1550 = vperm.slane %v1547, 1
    %v1551 = vperm.slane %v1547, 2
    %v1552 = vperm.slane %v1547, 3
    %v1685 = vunpack.c.l.b16 %v1419
    %v1686 = vunpack.c.h.b16 %v1419
    %v1687 = vunpack.c.l.b16 %v1420
    %v1688 = vunpack.c.h.b16 %v1420
    %v1689 = vunpack.c.l.b16 %v1421
    %v1690 = vunpack.c.h.b16 %v1421
    %v1691 = vunpack.c.l.b16 %v1422
    %v1692 = vunpack.c.h.b16 %v1422
    %v1693 = vunpack.c.l.b16 %v1423
    %v1694 = vunpack.c.h.b16 %v1423
    %v1695 = vunpack.c.l.b16 %v1424
    %v1696 = vunpack.c.h.b16 %v1424
    %v1697 = vunpack.c.l.b16 %v1425
    %v1698 = vunpack.c.h.b16 %v1425
    %v1699 = vunpack.c.l.b16 %v1426
    %v1700 = vunpack.c.h.b16 %v1426
    %v1701 = vunpack.c.l.b16 %v1427
    %v1702 = vunpack.c.h.b16 %v1427
    %v1703 = vunpack.c.l.b16 %v1428
    %v1704 = vunpack.c.h.b16 %v1428
    %v1705 = vunpack.c.l.b16 %v1429
    %v1706 = vunpack.c.h.b16 %v1429
    %v1707 = vunpack.c.l.b16 %v1430
    %v1708 = vunpack.c.h.b16 %v1430
    %v1709 = vunpack.c.l.b16 %v1431
    %v1710 = vunpack.c.h.b16 %v1431
    %v1711 = vunpack.c.l.b16 %v1432
    %v1712 = vunpack.c.h.b16 %v1432
    %v1713 = vunpack.c.l.b16 %v1433
    %v1714 = vunpack.c.h.b16 %v1433
    %v1715 = vunpack.c.l.b16 %v1434
    %v1716 = vunpack.c.h.b16 %v1434
    %v1717 = vunpack.c.l.b16 %v1435
    %v1718 = vunpack.c.h.b16 %v1435
    %v1719 = vunpack.c.l.b16 %v1436
    %v1720 = vunpack.c.h.b16 %v1436
    %v1721 = vunpack.c.l.b16 %v1437
    %v1722 = vunpack.c.h.b16 %v1437
    %v1723 = vunpack.c.l.b16 %v1438
    %v1724 = vunpack.c.h.b16 %v1438
    %v1725 = vunpack.c.l.b16 %v1439
    %v1726 = vunpack.c.h.b16 %v1439
    %v1727 = vunpack.c.l.b16 %v1440
    %v1728 = vunpack.c.h.b16 %v1440
    %v1729 = vunpack.c.l.b16 %v1441
    %v1730 = vunpack.c.h.b16 %v1441
    %v1731 = vunpack.c.l.b16 %v1442
    %v1732 = vunpack.c.h.b16 %v1442
    %v1733 = vunpack.c.l.b16 %v1443
    %v1734 = vunpack.c.h.b16 %v1443
    %v1735 = vunpack.c.l.b16 %v1444
    %v1736 = vunpack.c.h.b16 %v1444
    %v1737 = vunpack.c.l.b16 %v1445
    %v1738 = vunpack.c.h.b16 %v1445
    %v1739 = vunpack.c.l.b16 %v1446
    %v1740 = vunpack.c.h.b16 %v1446
    %v1741 = vunpack.c.l.b16 %v1447
    %v1742 = vunpack.c.h.b16 %v1447
    %v1743 = vunpack.c.l.b16 %v1448
    %v1744 = vunpack.c.h.b16 %v1448
    %v1745 = vunpack.c.l.b16 %v1449
    %v1746 = vunpack.c.h.b16 %v1449
    %v1747 = vunpack.c.l.b16 %v1450
    %v1748 = vunpack.c.h.b16 %v1450
    %v1749 = vunpack.c.l.b16 %v1451
    %v1750 = vunpack.c.h.b16 %v1451
    %v1751 = vunpack.c.l.b16 %v1452
    %v1752 = vunpack.c.h.b16 %v1452
    %v1753 = vunpack.c.l.b16 %v1453
    %v1754 = vunpack.c.h.b16 %v1453
    %v1755 = vunpack.c.l.b16 %v1454
    %v1756 = vunpack.c.h.b16 %v1454
    %v1757 = vunpack.c.l.b16 %v1455
    %v1758 = vunpack.c.h.b16 %v1455
    %v1759 = vunpack.c.l.b16 %v1456
    %v1760 = vunpack.c.h.b16 %v1456
    %v1761 = vunpack.c.l.b16 %v1457
    %v1762 = vunpack.c.h.b16 %v1457
    %v1763 = vunpack.c.l.b16 %v1458
    %v1764 = vunpack.c.h.b16 %v1458
    %v1765 = vunpack.c.l.b16 %v1459
    %v1766 = vunpack.c.h.b16 %v1459
    %v1767 = vunpack.c.l.b16 %v1460
    %v1768 = vunpack.c.h.b16 %v1460
    %v1769 = vunpack.c.l.b16 %v1461
    %v1770 = vunpack.c.h.b16 %v1461
    %v1771 = vunpack.c.l.b16 %v1462
    %v1772 = vunpack.c.h.b16 %v1462
    %v1773 = vunpack.c.l.b16 %v1463
    %v1774 = vunpack.c.h.b16 %v1463
    %v1775 = vunpack.c.l.b16 %v1464
    %v1776 = vunpack.c.h.b16 %v1464
    %v1777 = vunpack.c.l.b16 %v1465
    %v1778 = vunpack.c.h.b16 %v1465
    %v1779 = vunpack.c.l.b16 %v1466
    %v1780 = vunpack.c.h.b16 %v1466
    %v1781 = vunpack.c.l.b16 %v1467
    %v1782 = vunpack.c.h.b16 %v1467
    %v1783 = vunpack.c.l.b16 %v1468
    %v1784 = vunpack.c.h.b16 %v1468
    %v1785 = vunpack.c.l.b16 %v1469
    %v1786 = vunpack.c.h.b16 %v1469
    %v1787 = vunpack.c.l.b16 %v1470
    %v1788 = vunpack.c.h.b16 %v1470
    %v1789 = vunpack.c.l.b16 %v1471
    %v1790 = vunpack.c.h.b16 %v1471
    %v1791 = vunpack.c.l.b16 %v1472
    %v1792 = vunpack.c.h.b16 %v1472
    %v1793 = vunpack.c.l.b16 %v1473
    %v1794 = vunpack.c.h.b16 %v1473
    %v1795 = vunpack.c.l.b16 %v1474
    %v1796 = vunpack.c.h.b16 %v1474
    %v1797 = vunpack.c.l.b16 %v1475
    %v1798 = vunpack.c.h.b16 %v1475
    %v1799 = vunpack.c.l.b16 %v1476
    %v1800 = vunpack.c.h.b16 %v1476
    %v1801 = vunpack.c.l.b16 %v1477
    %v1802 = vunpack.c.h.b16 %v1477
    %v1803 = vunpack.c.l.b16 %v1478
    %v1804 = vunpack.c.h.b16 %v1478
    %v1805 = vunpack.c.l.b16 %v1479
    %v1806 = vunpack.c.h.b16 %v1479
    %v1807 = vunpack.c.l.b16 %v1480
    %v1808 = vunpack.c.h.b16 %v1480
    %v1809 = vunpack.c.l.b16 %v1481
    %v1810 = vunpack.c.h.b16 %v1481
    %v1811 = vunpack.c.l.b16 %v1482
    %v1812 = vunpack.c.h.b16 %v1482
    %v1813 = vunpack.c.l.b16 %v1483
    %v1814 = vunpack.c.h.b16 %v1483
    %v1815 = vunpack.c.l.b16 %v1484
    %v1816 = vunpack.c.h.b16 %v1484
    %v1817 = vunpack.c.l.b16 %v1485
    %v1818 = vunpack.c.h.b16 %v1485
    %v1819 = vunpack.c.l.b16 %v1486
    %v1820 = vunpack.c.h.b16 %v1486
    %v1821 = vunpack.c.l.b16 %v1487
    %v1822 = vunpack.c.h.b16 %v1487
    %v1823 = vunpack.c.l.b16 %v1488
    %v1824 = vunpack.c.h.b16 %v1488
    %v1825 = vunpack.c.l.b16 %v1489
    %v1826 = vunpack.c.h.b16 %v1489
    %v1827 = vunpack.c.l.b16 %v1490
    %v1828 = vunpack.c.h.b16 %v1490
    %v1829 = vunpack.c.l.b16 %v1491
    %v1830 = vunpack.c.h.b16 %v1491
    %v1831 = vunpack.c.l.b16 %v1492
    %v1832 = vunpack.c.h.b16 %v1492
    %v1833 = vunpack.c.l.b16 %v1493
    %v1834 = vunpack.c.h.b16 %v1493
    %v1835 = vunpack.c.l.b16 %v1494
    %v1836 = vunpack.c.h.b16 %v1494
    %v1837 = vunpack.c.l.b16 %v1495
    %v1838 = vunpack.c.h.b16 %v1495
    %v1839 = vunpack.c.l.b16 %v1496
    %v1840 = vunpack.c.h.b16 %v1496
    %v1841 = vunpack.c.l.b16 %v1497
    %v1842 = vunpack.c.h.b16 %v1497
    %v1843 = vunpack.c.l.b16 %v1498
    %v1844 = vunpack.c.h.b16 %v1498
    %v1845 = vunpack.c.l.b16 %v1499
    %v1846 = vunpack.c.h.b16 %v1499
    %v1847 = vunpack.c.l.b16 %v1500
    %v1848 = vunpack.c.h.b16 %v1500
    %v1849 = vunpack.c.l.b16 %v1501
    %v1850 = vunpack.c.h.b16 %v1501
    %v1851 = vunpack.c.l.b16 %v1502
    %v1852 = vunpack.c.h.b16 %v1502
    %v1853 = vunpack.c.l.b16 %v1503
    %v1854 = vunpack.c.h.b16 %v1503
    %v1855 = vunpack.c.l.b16 %v1504
    %v1856 = vunpack.c.h.b16 %v1504
    %v1857 = vunpack.c.l.b16 %v1505
    %v1858 = vunpack.c.h.b16 %v1505
    %v1859 = vunpack.c.l.b16 %v1506
    %v1860 = vunpack.c.h.b16 %v1506
    %v1861 = vunpack.c.l.b16 %v1507
    %v1862 = vunpack.c.h.b16 %v1507
    %v1863 = vunpack.c.l.b16 %v1508
    %v1864 = vunpack.c.h.b16 %v1508
    %v1865 = vunpack.c.l.b16 %v1509
    %v1866 = vunpack.c.h.b16 %v1509
    %v1867 = vunpack.c.l.b16 %v1510
    %v1868 = vunpack.c.h.b16 %v1510
    %v1869 = vunpack.c.l.b16 %v1511
    %v1870 = vunpack.c.h.b16 %v1511
    %v1871 = vunpack.c.l.b16 %v1512
    %v1872 = vunpack.c.h.b16 %v1512
    %v1873 = vunpack.c.l.b16 %v1513
    %v1874 = vunpack.c.h.b16 %v1513
    %v1875 = vunpack.c.l.b16 %v1514
    %v1876 = vunpack.c.h.b16 %v1514
    %v1877 = vunpack.c.l.b16 %v1515
    %v1878 = vunpack.c.h.b16 %v1515
    %v1879 = vunpack.c.l.b16 %v1516
    %v1880 = vunpack.c.h.b16 %v1516
    %v1881 = vunpack.c.l.b16 %v1517
    %v1882 = vunpack.c.h.b16 %v1517
    %v1883 = vunpack.c.l.b16 %v1518
    %v1884 = vunpack.c.h.b16 %v1518
    %v1885 = vunpack.c.l.b16 %v1519
    %v1886 = vunpack.c.h.b16 %v1519
    %v1887 = vunpack.c.l.b16 %v1520
    %v1888 = vunpack.c.h.b16 %v1520
    %v1889 = vunpack.c.l.b16 %v1521
    %v1890 = vunpack.c.h.b16 %v1521
    %v1891 = vunpack.c.l.b16 %v1522
    %v1892 = vunpack.c.h.b16 %v1522
    %v1893 = vunpack.c.l.b16 %v1523
    %v1894 = vunpack.c.h.b16 %v1523
    %v1895 = vunpack.c.l.b16 %v1524
    %v1896 = vunpack.c.h.b16 %v1524
    %v1897 = vunpack.c.l.b16 %v1525
    %v1898 = vunpack.c.h.b16 %v1525
    %v1899 = vunpack.c.l.b16 %v1526
    %v1900 = vunpack.c.h.b16 %v1526
    %v1901 = vunpack.c.l.b16 %v1527
    %v1902 = vunpack.c.h.b16 %v1527
    %v1903 = vunpack.c.l.b16 %v1528
    %v1904 = vunpack.c.h.b16 %v1528
    %v1905 = vunpack.c.l.b16 %v1529
    %v1906 = vunpack.c.h.b16 %v1529
    %v1907 = vunpack.c.l.b16 %v1530
    %v1908 = vunpack.c.h.b16 %v1530
    %v1909 = vunpack.c.l.b16 %v1531
    %v1910 = vunpack.c.h.b16 %v1531
    %v1911 = vunpack.c.l.b16 %v1532
    %v1912 = vunpack.c.h.b16 %v1532
    %v1913 = vunpack.c.l.b16 %v1533
    %v1914 = vunpack.c.h.b16 %v1533
    %v1915 = vunpack.c.l.b16 %v1534
    %v1916 = vunpack.c.h.b16 %v1534
    %v1917 = vunpack.c.l.b16 %v1535
    %v1918 = vunpack.c.h.b16 %v1535
    %v1919 = vunpack.c.l.b16 %v1536
    %v1920 = vunpack.c.h.b16 %v1536
    %v1921 = vunpack.c.l.b16 %v1537
    %v1922 = vunpack.c.h.b16 %v1537
    %v1923 = vunpack.c.l.b16 %v1538
    %v1924 = vunpack.c.h.b16 %v1538
    %v1925 = vunpack.c.l.b16 %v1539
    %v1926 = vunpack.c.h.b16 %v1539
    %v1927 = vunpack.c.l.b16 %v1540
    %v1928 = vunpack.c.h.b16 %v1540
    %v1929 = vunpack.c.l.b16 %v1541
    %v1930 = vunpack.c.h.b16 %v1541
    %v1931 = vunpack.c.l.b16 %v1542
    %v1932 = vunpack.c.h.b16 %v1542
    %v1933 = vunpack.c.l.b16 %v1543
    %v1934 = vunpack.c.h.b16 %v1543
    %v1935 = vunpack.c.l.b16 %v1544
    %v1936 = vunpack.c.h.b16 %v1544
    %v1937 = vunpack.c.l.b16 %v1545
    %v1938 = vunpack.c.h.b16 %v1545
    %v1939 = vunpack.c.l.b16 %v1546
    %v1940 = vunpack.c.h.b16 %v1546
    %v1941 = vpack.c.b16 %v1689, %v1685
    %v1942 = vpack.c.b16 %v1690, %v1686
    %v1943 = vpack.c.b16 %v1691, %v1687
    %v1944 = vpack.c.b16 %v1692, %v1688
    %v1945 = vpack.c.b16 %v1697, %v1693
    %v1946 = vpack.c.b16 %v1698, %v1694
    %v1947 = vpack.c.b16 %v1699, %v1695
    %v1948 = vpack.c.b16 %v1700, %v1696
    %v1949 = vpack.c.b16 %v1705, %v1701
    %v1950 = vpack.c.b16 %v1706, %v1702
    %v1951 = vpack.c.b16 %v1707, %v1703
    %v1952 = vpack.c.b16 %v1708, %v1704
    %v1953 = vpack.c.b16 %v1713, %v1709
    %v1954 = vpack.c.b16 %v1714, %v1710
    %v1955 = vpack.c.b16 %v1715, %v1711
    %v1956 = vpack.c.b16 %v1716, %v1712
    %v1957 = vpack.c.b16 %v1721, %v1717
    %v1958 = vpack.c.b16 %v1722, %v1718
    %v1959 = vpack.c.b16 %v1723, %v1719
    %v1960 = vpack.c.b16 %v1724, %v1720
    %v1961 = vpack.c.b16 %v1729, %v1725
    %v1962 = vpack.c.b16 %v1730, %v1726
    %v1963 = vpack.c.b16 %v1731, %v1727
    %v1964 = vpack.c.b16 %v1732, %v1728
    %v1965 = vpack.c.b16 %v1737, %v1733
    %v1966 = vpack.c.b16 %v1738, %v1734
    %v1967 = vpack.c.b16 %v1739, %v1735
    %v1968 = vpack.c.b16 %v1740, %v1736
    %v1969 = vpack.c.b16 %v1745, %v1741
    %v1970 = vpack.c.b16 %v1746, %v1742
    %v1971 = vpack.c.b16 %v1747, %v1743
    %v1972 = vpack.c.b16 %v1748, %v1744
    %v1973 = vpack.c.b16 %v1753, %v1749
    %v1974 = vpack.c.b16 %v1754, %v1750
    %v1975 = vpack.c.b16 %v1755, %v1751
    %v1976 = vpack.c.b16 %v1756, %v1752
    %v1977 = vpack.c.b16 %v1761, %v1757
    %v1978 = vpack.c.b16 %v1762, %v1758
    %v1979 = vpack.c.b16 %v1763, %v1759
    %v1980 = vpack.c.b16 %v1764, %v1760
    %v1981 = vpack.c.b16 %v1769, %v1765
    %v1982 = vpack.c.b16 %v1770, %v1766
    %v1983 = vpack.c.b16 %v1771, %v1767
    %v1984 = vpack.c.b16 %v1772, %v1768
    %v1985 = vpack.c.b16 %v1777, %v1773
    %v1986 = vpack.c.b16 %v1778, %v1774
    %v1987 = vpack.c.b16 %v1779, %v1775
    %v1988 = vpack.c.b16 %v1780, %v1776
    %v1989 = vpack.c.b16 %v1785, %v1781
    %v1990 = vpack.c.b16 %v1786, %v1782
    %v1991 = vpack.c.b16 %v1787, %v1783
    %v1992 = vpack.c.b16 %v1788, %v1784
    %v1993 = vpack.c.b16 %v1793, %v1789
    %v1994 = vpack.c.b16 %v1794, %v1790
    %v1995 = vpack.c.b16 %v1795, %v1791
    %v1996 = vpack.c.b16 %v1796, %v1792
    %v1997 = vpack.c.b16 %v1801, %v1797
    %v1998 = vpack.c.b16 %v1802, %v1798
    %v1999 = vpack.c.b16 %v1803, %v1799
    %v2000 = vpack.c.b16 %v1804, %v1800
    %v2001 = vpack.c.b16 %v1809, %v1805
    %v2002 = vpack.c.b16 %v1810, %v1806
    %v2003 = vpack.c.b16 %v1811, %v1807
    %v2004 = vpack.c.b16 %v1812, %v1808
    %v2005 = vpack.c.b16 %v1817, %v1813
    %v2006 = vpack.c.b16 %v1818, %v1814
    %v2007 = vpack.c.b16 %v1819, %v1815
    %v2008 = vpack.c.b16 %v1820, %v1816
    %v2009 = vpack.c.b16 %v1825, %v1821
    %v2010 = vpack.c.b16 %v1826, %v1822
    %v2011 = vpack.c.b16 %v1827, %v1823
    %v2012 = vpack.c.b16 %v1828, %v1824
    %v2013 = vpack.c.b16 %v1833, %v1829
    %v2014 = vpack.c.b16 %v1834, %v1830
    %v2015 = vpack.c.b16 %v1835, %v1831
    %v2016 = vpack.c.b16 %v1836, %v1832
    %v2017 = vpack.c.b16 %v1841, %v1837
    %v2018 = vpack.c.b16 %v1842, %v1838
    %v2019 = vpack.c.b16 %v1843, %v1839
    %v2020 = vpack.c.b16 %v1844, %v1840
    %v2021 = vpack.c.b16 %v1849, %v1845
    %v2022 = vpack.c.b16 %v1850, %v1846
    %v2023 = vpack.c.b16 %v1851, %v1847
    %v2024 = vpack.c.b16 %v1852, %v1848
    %v2025 = vpack.c.b16 %v1857, %v1853
    %v2026 = vpack.c.b16 %v1858, %v1854
    %v2027 = vpack.c.b16 %v1859, %v1855
    %v2028 = vpack.c.b16 %v1860, %v1856
    %v2029 = vpack.c.b16 %v1865, %v1861
    %v2030 = vpack.c.b16 %v1866, %v1862
    %v2031 = vpack.c.b16 %v1867, %v1863
    %v2032 = vpack.c.b16 %v1868, %v1864
    %v2033 = vpack.c.b16 %v1873, %v1869
    %v2034 = vpack.c.b16 %v1874, %v1870
    %v2035 = vpack.c.b16 %v1875, %v1871
    %v2036 = vpack.c.b16 %v1876, %v1872
    %v2037 = vpack.c.b16 %v1881, %v1877
    %v2038 = vpack.c.b16 %v1882, %v1878
    %v2039 = vpack.c.b16 %v1883, %v1879
    %v2040 = vpack.c.b16 %v1884, %v1880
    %v2041 = vpack.c.b16 %v1889, %v1885
    %v2042 = vpack.c.b16 %v1890, %v1886
    %v2043 = vpack.c.b16 %v1891, %v1887
    %v2044 = vpack.c.b16 %v1892, %v1888
    %v2045 = vpack.c.b16 %v1897, %v1893
    %v2046 = vpack.c.b16 %v1898, %v1894
    %v2047 = vpack.c.b16 %v1899, %v1895
    %v2048 = vpack.c.b16 %v1900, %v1896
    %v2049 = vpack.c.b16 %v1905, %v1901
    %v2050 = vpack.c.b16 %v1906, %v1902
    %v2051 = vpack.c.b16 %v1907, %v1903
    %v2052 = vpack.c.b16 %v1908, %v1904
    %v2053 = vpack.c.b16 %v1913, %v1909
    %v2054 = vpack.c.b16 %v1914, %v1910
    %v2055 = vpack.c.b16 %v1915, %v1911
    %v2056 = vpack.c.b16 %v1916, %v1912
    %v2057 = vpack.c.b16 %v1921, %v1917
    %v2058 = vpack.c.b16 %v1922, %v1918
    %v2059 = vpack.c.b16 %v1923, %v1919
    %v2060 = vpack.c.b16 %v1924, %v1920
    %v2061 = vpack.c.b16 %v1929, %v1925
    %v2062 = vpack.c.b16 %v1930, %v1926
    %v2063 = vpack.c.b16 %v1931, %v1927
    %v2064 = vpack.c.b16 %v1932, %v1928
    %v2065 = vpack.c.b16 %v1937, %v1933
    %v2066 = vpack.c.b16 %v1938, %v1934
    %v2067 = vpack.c.b16 %v1939, %v1935
    %v2068 = vpack.c.b16 %v1940, %v1936
    %2197 = vmatpush.bf16.msra.mxu0 %v1969
    %2198 = vmatpush.bf16.msra.mxu0 %v1965
    %2199 = vmatpush.bf16.msra.mxu0 %v1961
    %2200 = vmatpush.bf16.msra.mxu0 %v1957
    %2201 = vmatpush.bf16.msra.mxu0 %v1953
    %2202 = vmatpush.bf16.msra.mxu0 %v1949
    %2203 = vmatpush.bf16.msra.mxu0 %v1945
    %2204 = vmatpush.bf16.msra.mxu0 %v1941
    %2205 = vmatmul.bf16.gmra.mxu0 %v1415
    %v2206 = vpop.f32.mrf.mxu0
    %v2207 = vadd.f32 %v1549, %v2206
    %v2208 = vpop.f32.mrf.mxu0
    %v2209 = vadd.f32 %v1549, %v2208
    %2210 = vdwg.mxu0
    %2211 = vmatpush.bf16.msra.mxu0 %v2001
    %2212 = vmatpush.bf16.msra.mxu0 %v1997
    %2213 = vmatpush.bf16.msra.mxu0 %v1993
    %2214 = vmatpush.bf16.msra.mxu0 %v1989
    %2215 = vmatpush.bf16.msra.mxu0 %v1985
    %2216 = vmatpush.bf16.msra.mxu0 %v1981
    %2217 = vmatpush.bf16.msra.mxu0 %v1977
    %2218 = vmatpush.bf16.msra.mxu0 %v1973
    %2219 = vmatmul.bf16.gmra.mxu0 %v1416
    %v2220 = vpop.f32.mrf.mxu0
    %v2221 = vadd.f32 %v2207, %v2220
    %v2222 = vpop.f32.mrf.mxu0
    %v2223 = vadd.f32 %v2209, %v2222
    %2224 = vdwg.mxu0
    %2225 = vmatpush.bf16.msra.mxu0 %v2033
    %2226 = vmatpush.bf16.msra.mxu0 %v2029
    %2227 = vmatpush.bf16.msra.mxu0 %v2025
    %2228 = vmatpush.bf16.msra.mxu0 %v2021
    %2229 = vmatpush.bf16.msra.mxu0 %v2017
    %2230 = vmatpush.bf16.msra.mxu0 %v2013
    %2231 = vmatpush.bf16.msra.mxu0 %v2009
    %2232 = vmatpush.bf16.msra.mxu0 %v2005
    %2233 = vmatmul.bf16.gmra.mxu0 %v1417
    %v2234 = vpop.f32.mrf.mxu0
    %v2235 = vadd.f32 %v2221, %v2234
    %v2236 = vpop.f32.mrf.mxu0
    %v2237 = vadd.f32 %v2223, %v2236
    %2238 = vdwg.mxu0
    %2239 = vmatpush.bf16.msra.mxu0 %v2065
    %2240 = vmatpush.bf16.msra.mxu0 %v2061
    %2241 = vmatpush.bf16.msra.mxu0 %v2057
    %2242 = vmatpush.bf16.msra.mxu0 %v2053
    %2243 = vmatpush.bf16.msra.mxu0 %v2049
    %2244 = vmatpush.bf16.msra.mxu0 %v2045
    %2245 = vmatpush.bf16.msra.mxu0 %v2041
    %2246 = vmatpush.bf16.msra.mxu0 %v2037
    %2247 = vmatmul.bf16.gmra.mxu0 %v1418
    %v2248 = vpop.f32.mrf.mxu0
    %v2249 = vadd.f32 %v2235, %v2248
    %v2250 = vpop.f32.mrf.mxu0
    %v2251 = vadd.f32 %v2237, %v2250
    %2252 = vdwg.mxu0
    %2253 = vmatpush.bf16.msra.mxu0 %v1970
    %2254 = vmatpush.bf16.msra.mxu0 %v1966
    %2255 = vmatpush.bf16.msra.mxu0 %v1962
    %2256 = vmatpush.bf16.msra.mxu0 %v1958
    %2257 = vmatpush.bf16.msra.mxu0 %v1954
    %2258 = vmatpush.bf16.msra.mxu0 %v1950
    %2259 = vmatpush.bf16.msra.mxu0 %v1946
    %2260 = vmatpush.bf16.msra.mxu0 %v1942
    %2261 = vmatmul.bf16.gmra.mxu0 %v1415
    %v2262 = vpop.f32.mrf.mxu0
    %v2263 = vadd.f32 %v1550, %v2262
    %v2264 = vpop.f32.mrf.mxu0
    %v2265 = vadd.f32 %v1550, %v2264
    %2266 = vdwg.mxu0
    %2267 = vmatpush.bf16.msra.mxu0 %v2002
    %2268 = vmatpush.bf16.msra.mxu0 %v1998
    %2269 = vmatpush.bf16.msra.mxu0 %v1994
    %2270 = vmatpush.bf16.msra.mxu0 %v1990
    %2271 = vmatpush.bf16.msra.mxu0 %v1986
    %2272 = vmatpush.bf16.msra.mxu0 %v1982
    %2273 = vmatpush.bf16.msra.mxu0 %v1978
    %2274 = vmatpush.bf16.msra.mxu0 %v1974
    %2275 = vmatmul.bf16.gmra.mxu0 %v1416
    %v2276 = vpop.f32.mrf.mxu0
    %v2277 = vadd.f32 %v2263, %v2276
    %v2278 = vpop.f32.mrf.mxu0
    %v2279 = vadd.f32 %v2265, %v2278
    %2280 = vdwg.mxu0
    %2281 = vmatpush.bf16.msra.mxu0 %v2034
    %2282 = vmatpush.bf16.msra.mxu0 %v2030
    %2283 = vmatpush.bf16.msra.mxu0 %v2026
    %2284 = vmatpush.bf16.msra.mxu0 %v2022
    %2285 = vmatpush.bf16.msra.mxu0 %v2018
    %2286 = vmatpush.bf16.msra.mxu0 %v2014
    %2287 = vmatpush.bf16.msra.mxu0 %v2010
    %2288 = vmatpush.bf16.msra.mxu0 %v2006
    %2289 = vmatmul.bf16.gmra.mxu0 %v1417
    %v2290 = vpop.f32.mrf.mxu0
    %v2291 = vadd.f32 %v2277, %v2290
    %v2292 = vpop.f32.mrf.mxu0
    %v2293 = vadd.f32 %v2279, %v2292
    %2294 = vdwg.mxu0
    %2295 = vmatpush.bf16.msra.mxu0 %v2066
    %2296 = vmatpush.bf16.msra.mxu0 %v2062
    %2297 = vmatpush.bf16.msra.mxu0 %v2058
    %2298 = vmatpush.bf16.msra.mxu0 %v2054
    %2299 = vmatpush.bf16.msra.mxu0 %v2050
    %2300 = vmatpush.bf16.msra.mxu0 %v2046
    %2301 = vmatpush.bf16.msra.mxu0 %v2042
    %2302 = vmatpush.bf16.msra.mxu0 %v2038
    %2303 = vmatmul.bf16.gmra.mxu0 %v1418
    %v2304 = vpop.f32.mrf.mxu0
    %v2305 = vadd.f32 %v2291, %v2304
    %v2306 = vpop.f32.mrf.mxu0
    %v2307 = vadd.f32 %v2293, %v2306
    %2308 = vdwg.mxu0
    %2309 = vmatpush.bf16.msra.mxu0 %v1971
    %2310 = vmatpush.bf16.msra.mxu0 %v1967
    %2311 = vmatpush.bf16.msra.mxu0 %v1963
    %2312 = vmatpush.bf16.msra.mxu0 %v1959
    %2313 = vmatpush.bf16.msra.mxu0 %v1955
    %2314 = vmatpush.bf16.msra.mxu0 %v1951
    %2315 = vmatpush.bf16.msra.mxu0 %v1947
    %2316 = vmatpush.bf16.msra.mxu0 %v1943
    %2317 = vmatmul.bf16.gmra.mxu0 %v1415
    %v2318 = vpop.f32.mrf.mxu0
    %v2319 = vadd.f32 %v1551, %v2318
    %v2320 = vpop.f32.mrf.mxu0
    %v2321 = vadd.f32 %v1551, %v2320
    %2322 = vdwg.mxu0
    %2323 = vmatpush.bf16.msra.mxu0 %v2003
    %2324 = vmatpush.bf16.msra.mxu0 %v1999
    %2325 = vmatpush.bf16.msra.mxu0 %v1995
    %2326 = vmatpush.bf16.msra.mxu0 %v1991
    %2327 = vmatpush.bf16.msra.mxu0 %v1987
    %2328 = vmatpush.bf16.msra.mxu0 %v1983
    %2329 = vmatpush.bf16.msra.mxu0 %v1979
    %2330 = vmatpush.bf16.msra.mxu0 %v1975
    %2331 = vmatmul.bf16.gmra.mxu0 %v1416
    %v2332 = vpop.f32.mrf.mxu0
    %v2333 = vadd.f32 %v2319, %v2332
    %v2334 = vpop.f32.mrf.mxu0
    %v2335 = vadd.f32 %v2321, %v2334
    %2336 = vdwg.mxu0
    %2337 = vmatpush.bf16.msra.mxu0 %v2035
    %2338 = vmatpush.bf16.msra.mxu0 %v2031
    %2339 = vmatpush.bf16.msra.mxu0 %v2027
    %2340 = vmatpush.bf16.msra.mxu0 %v2023
    %2341 = vmatpush.bf16.msra.mxu0 %v2019
    %2342 = vmatpush.bf16.msra.mxu0 %v2015
    %2343 = vmatpush.bf16.msra.mxu0 %v2011
    %2344 = vmatpush.bf16.msra.mxu0 %v2007
    %2345 = vmatmul.bf16.gmra.mxu0 %v1417
    %v2346 = vpop.f32.mrf.mxu0
    %v2347 = vadd.f32 %v2333, %v2346
    %v2348 = vpop.f32.mrf.mxu0
    %v2349 = vadd.f32 %v2335, %v2348
    %2350 = vdwg.mxu0
    %2351 = vmatpush.bf16.msra.mxu0 %v2067
    %2352 = vmatpush.bf16.msra.mxu0 %v2063
    %2353 = vmatpush.bf16.msra.mxu0 %v2059
    %2354 = vmatpush.bf16.msra.mxu0 %v2055
    %2355 = vmatpush.bf16.msra.mxu0 %v2051
    %2356 = vmatpush.bf16.msra.mxu0 %v2047
    %2357 = vmatpush.bf16.msra.mxu0 %v2043
    %2358 = vmatpush.bf16.msra.mxu0 %v2039
    %2359 = vmatmul.bf16.gmra.mxu0 %v1418
    %v2360 = vpop.f32.mrf.mxu0
    %v2361 = vadd.f32 %v2347, %v2360
    %v2362 = vpop.f32.mrf.mxu0
    %v2363 = vadd.f32 %v2349, %v2362
    %2364 = vdwg.mxu0
    %2365 = vmatpush.bf16.msra.mxu0 %v1972
    %2366 = vmatpush.bf16.msra.mxu0 %v1968
    %2367 = vmatpush.bf16.msra.mxu0 %v1964
    %2368 = vmatpush.bf16.msra.mxu0 %v1960
    %2369 = vmatpush.bf16.msra.mxu0 %v1956
    %2370 = vmatpush.bf16.msra.mxu0 %v1952
    %2371 = vmatpush.bf16.msra.mxu0 %v1948
    %2372 = vmatpush.bf16.msra.mxu0 %v1944
    %2373 = vmatmul.bf16.gmra.mxu0 %v1415
    %v2374 = vpop.f32.mrf.mxu0
    %v2375 = vadd.f32 %v1552, %v2374
    %v2376 = vpop.f32.mrf.mxu0
    %v2377 = vadd.f32 %v1552, %v2376
    %2378 = vdwg.mxu0
    %2379 = vmatpush.bf16.msra.mxu0 %v2004
    %2380 = vmatpush.bf16.msra.mxu0 %v2000
    %2381 = vmatpush.bf16.msra.mxu0 %v1996
    %2382 = vmatpush.bf16.msra.mxu0 %v1992
    %2383 = vmatpush.bf16.msra.mxu0 %v1988
    %2384 = vmatpush.bf16.msra.mxu0 %v1984
    %2385 = vmatpush.bf16.msra.mxu0 %v1980
    %2386 = vmatpush.bf16.msra.mxu0 %v1976
    %2387 = vmatmul.bf16.gmra.mxu0 %v1416
    %v2388 = vpop.f32.mrf.mxu0
    %v2389 = vadd.f32 %v2375, %v2388
    %v2390 = vpop.f32.mrf.mxu0
    %v2391 = vadd.f32 %v2377, %v2390
    %2392 = vdwg.mxu0
    %2393 = vmatpush.bf16.msra.mxu0 %v2036
    %2394 = vmatpush.bf16.msra.mxu0 %v2032
    %2395 = vmatpush.bf16.msra.mxu0 %v2028
    %2396 = vmatpush.bf16.msra.mxu0 %v2024
    %2397 = vmatpush.bf16.msra.mxu0 %v2020
    %2398 = vmatpush.bf16.msra.mxu0 %v2016
    %2399 = vmatpush.bf16.msra.mxu0 %v2012
    %2400 = vmatpush.bf16.msra.mxu0 %v2008
    %2401 = vmatmul.bf16.gmra.mxu0 %v1417
    %v2402 = vpop.f32.mrf.mxu0
    %v2403 = vadd.f32 %v2389, %v2402
    %v2404 = vpop.f32.mrf.mxu0
    %v2405 = vadd.f32 %v2391, %v2404
    %2406 = vdwg.mxu0
    %2407 = vmatpush.bf16.msra.mxu0 %v2068
    %2408 = vmatpush.bf16.msra.mxu0 %v2064
    %2409 = vmatpush.bf16.msra.mxu0 %v2060
    %2410 = vmatpush.bf16.msra.mxu0 %v2056
    %2411 = vmatpush.bf16.msra.mxu0 %v2052
    %2412 = vmatpush.bf16.msra.mxu0 %v2048
    %2413 = vmatpush.bf16.msra.mxu0 %v2044
    %2414 = vmatpush.bf16.msra.mxu0 %v2040
    %2415 = vmatmul.bf16.gmra.mxu0 %v1418
    %v2416 = vpop.f32.mrf.mxu0
    %v2417 = vadd.f32 %v2403, %v2416
    %v2418 = vpop.f32.mrf.mxu0
    %v2419 = vadd.f32 %v2405, %v2418
    %2420 = vdwg.mxu0
    %v2421 = vmax.f32 %v2249, 0.0
    %v2422 = vmax.f32 %v2305, 0.0
    %v2423 = vmax.f32 %v2361, 0.0
    %v2424 = vmax.f32 %v2417, 0.0
    %v2425 = vmax.f32 %v2251, 0.0
    %v2426 = vmax.f32 %v2307, 0.0
    %v2427 = vmax.f32 %v2363, 0.0
    %v2428 = vmax.f32 %v2419, 0.0
    %v2429 = vpack.c.bf16 %v2422, %v2421
    %v2430 = vpack.c.bf16 %v2424, %v2423
    %v2431 = vpack.c.bf16 %v2426, %v2425
    %v2432 = vpack.c.bf16 %v2428, %v2427
    %2433 = vst [vmem:[#allocation14] sm:$0xff] %v2429
    %2434 = vst [vmem:[#allocation14 + $0x8] sm:$0xff] %v2430
    %2435 = vst [vmem:[#allocation14 + $0x10] sm:$0xff] %v2431
    %2436 = vst [vmem:[#allocation14 + $0x18] sm:$0xff] %v2432
    // Predicated region
    $region54: #{tpu_custom_call.1} parent=1 // pred_check
      _
    $region55: #{tpu_custom_call.1} parent=1 // pred_check_branch
      %2438 = sbr.rel (0) target = $region57
    $region56: #{tpu_custom_call.1} parent=1 // pred_region
      %2440 = vsyncadd [#allocation5], 0
      %s2441 = sshll.u32 [#allocation14], 4
      %s2442 = int_to_ptr.vmem [resolvable:$true] %s2441
      %s2443 = sshll.u32 %s7, 4
      %s2444 = int_to_ptr.hbm [resolvable:$true] %s2443
      %2449 = dma.vmem_to_hbm [thread:$0]  %s2442, 512, %s2444, [#allocation5], 256, 256, 16
    $region57: #{tpu_custom_call.1} parent=1 // pred_fallthru
      _
    // Predicated region
    $region58: #{tpu_custom_call.1} parent=1 // pred_check
      _
    $region59: #{tpu_custom_call.1} parent=1 // pred_check_branch
      %2451 = sbr.rel (0) target = $region61
    $region60: #{tpu_custom_call.1} parent=1 // pred_region
      %2453 = dma.done [#allocation5], 512
    $region61: #{tpu_custom_call.1} parent=1 // pred_fallthru
      _
    %2454 = vsyncpa [#allocation4], 1
    %2455 = vsyncpa [#allocation7], 1
    %2456 = vsyncpa [#allocation10], 1
    %2457 = vsyncpa [#allocation13], 1
    %2458 = vsyncpa [#allocation5], 1

</llo_original>
